<compile_context>
chip_gen: v5e
topology: v5e:2x2
jax: 0.10.0
libtpu: 0.0.40
codegen_flags: <defaults>
</compile_context>

<pallas_src>
import functools

import jax
import jax.numpy as jnp
from jax.experimental import pallas as pl
from jax.experimental.pallas import tpu as pltpu

EMBED_DIM = 20
NUM_HEADS = 2
HEAD_DIM = EMBED_DIM // NUM_HEADS
SCALE = HEAD_DIM ** (-0.5)
NEG_BIG = -1e30  # additive bias that makes cross-batch probabilities exactly 0
MM_PRECISION = jax.lax.Precision.HIGHEST  # full-f32 matmuls in kernel AND reference


def _siglip_attn_kernel(x_ref, w_ref, b_ref, *rest, batch, seq, has_mask):
    # x_ref:   (B*T, E)
    # w_ref:   (E, 4E)  = [Wq^T | Wk^T | Wv^T | Wo^T]
    # b_ref:   (1, 4E)  = [bq | bk | bv | bo]
    # bias_ref (optional): (B*T, B*T) additive bias (user mask on diag blocks,
    #                      NEG_BIG on cross-batch blocks)
    # out_ref: (B*T, E)
    # aw_ref:  (H, B*T, B*T) batch-fused attention probabilities
    if has_mask:
        bias_ref, out_ref, aw_ref = rest
    else:
        out_ref, aw_ref = rest
        bias_ref = None

    bt = batch * seq
    x = x_ref[...]            # (BT, E) f32
    w = w_ref[...]            # (E, 4E) f32
    b = b_ref[...]            # (1, 4E) f32

    # --- One fused QKV projection on the MXU: (BT,E) @ (E,3E) -> (BT,3E). ---
    qkv = jax.lax.dot_general(
        x, w[:, :3 * EMBED_DIM], (((1,), (0,)), ((), ())),
        precision=MM_PRECISION, preferred_element_type=jnp.float32)
    qkv = qkv + b[:, :3 * EMBED_DIM]

    # --- Additive bias: block-diagonal over batches (+ optional user mask). ---
    if has_mask:
        bias = bias_ref[...]                      # already fused in the wrapper
    else:
        r = jax.lax.broadcasted_iota(jnp.int32, (bt, bt), 0)
        c = jax.lax.broadcasted_iota(jnp.int32, (bt, bt), 1)
        same_batch = jnp.zeros((bt, bt), dtype=jnp.bool_)
        for bi in range(batch):                   # static unroll (batch = 2)
            lo = bi * seq
            hi = lo + seq
            blk = (r >= lo) & (r < hi) & (c >= lo) & (c < hi)
            same_batch = jnp.logical_or(same_batch, blk)
        bias = jnp.where(same_batch, jnp.float32(0.0), jnp.float32(NEG_BIG))

    o_heads = []
    for h in range(NUM_HEADS):                    # static unroll (NUM_HEADS = 2)
        # Per-head q/k/v are static lane slices of the fused projection result.
        q_h = qkv[:, h * HEAD_DIM:(h + 1) * HEAD_DIM]                              # (BT, D)
        k_h = qkv[:, EMBED_DIM + h * HEAD_DIM:EMBED_DIM + (h + 1) * HEAD_DIM]      # (BT, D)
        v_h = qkv[:, 2 * EMBED_DIM + h * HEAD_DIM:2 * EMBED_DIM + (h + 1) * HEAD_DIM]

        # Batch-fused scores: (BT,D) @ (BT,D)^T -> (BT,BT); cross-batch entries
        # are killed exactly by the block-diagonal bias.
        s = jax.lax.dot_general(
            q_h, k_h, (((1,), (1,)), ((), ())),
            precision=MM_PRECISION, preferred_element_type=jnp.float32) * SCALE
        s = s + bias

        # Exact softmax over the key axis (exp(-1e30 - max) == 0 exactly).
        s = s - jnp.max(s, axis=-1, keepdims=True)
        e = jnp.exp(s)
        p = e / jnp.sum(e, axis=-1, keepdims=True)

        # Direct store of this head's probabilities (no concatenate epilogue).
        aw_ref[h, :, :] = p.astype(aw_ref.dtype)

        o_heads.append(jax.lax.dot_general(
            p, v_h, (((1,), (0,)), ((), ())),
            precision=MM_PRECISION, preferred_element_type=jnp.float32))    # (BT, D)

    # Lane-concat of the head outputs, then one fused output projection.
    o = jnp.concatenate(o_heads, axis=-1)                                   # (BT, E)
    out = jax.lax.dot_general(
        o, w[:, 3 * EMBED_DIM:], (((1,), (0,)), ((), ())),
        precision=MM_PRECISION, preferred_element_type=jnp.float32)
    out_ref[...] = (out + b[:, 3 * EMBED_DIM:]).astype(out_ref.dtype)


def pack_siglip_params(params):
    """Called ONCE per parameter set (outside the per-call jitted path).

    Returns a single (E, 4E) weight slab [Wq^T|Wk^T|Wv^T|Wo^T] and a single
    (1, 4E) bias slab [bq|bk|bv|bo].
    """
    w_all = jnp.concatenate(
        [params["wq"].T, params["wk"].T, params["wv"].T, params["wo"].T],
        axis=1).astype(jnp.float32)                         # (E, 4E)
    b_all = jnp.concatenate(
        [params["bq"], params["bk"], params["bv"], params["bo"]]
    ).reshape(1, 4 * EMBED_DIM).astype(jnp.float32)         # (1, 4E)
    return {"w_all": w_all, "b_all": b_all}


def _forward(hidden_states, w_all, b_all, attention_mask):
    B, T, E = hidden_states.shape
    assert E == EMBED_DIM
    BT = B * T
    has_mask = attention_mask is not None

    x2d = hidden_states.reshape(BT, E).astype(jnp.float32)

    inputs = [x2d, w_all, b_all]
    in_specs = [
        pl.BlockSpec((BT, E), lambda i: (0, 0)),
        pl.BlockSpec((E, 4 * E), lambda i: (0, 0)),
        pl.BlockSpec((1, 4 * E), lambda i: (0, 0)),
    ]
    if has_mask:
        # NOTE: assumes the PyTorch contract — mask is (B, 1, T, T), broadcast
        # over heads. Fuse it with the cross-batch -1e30 block-diagonal bias.
        m = attention_mask.astype(jnp.float32).reshape(B, T, T)
        ind = jnp.eye(B, dtype=bool)[:, None, :, None]          # (B,1,B,1)
        bias = jnp.where(ind, m[:, :, None, :], jnp.float32(NEG_BIG))  # (B,T,B,T)
        bias = bias.reshape(BT, BT)
        inputs.append(bias)
        in_specs.append(pl.BlockSpec((BT, BT), lambda i: (0, 0)))

    out_shapes = (
        jax.ShapeDtypeStruct((BT, E), hidden_states.dtype),
        jax.ShapeDtypeStruct((NUM_HEADS, BT, BT), jnp.float32),
    )
    out_specs = [
        pl.BlockSpec((BT, E), lambda i: (0, 0)),
        pl.BlockSpec((NUM_HEADS, BT, BT), lambda i: (0, 0, 0)),
    ]

    kernel = functools.partial(_siglip_attn_kernel, batch=B, seq=T,
                               has_mask=has_mask)

    out2d, aw_full = pl.pallas_call(
        kernel,
        out_shape=out_shapes,
        grid_spec=pltpu.PrefetchScalarGridSpec(
            num_scalar_prefetch=0,
            grid=(1,),                       # single step: whole problem per call
            in_specs=in_specs,
            out_specs=out_specs,
        ),
        compiler_params=pltpu.CompilerParams(
            dimension_semantics=("arbitrary",)),
    )(*inputs)

    attn_output = out2d.reshape(B, T, E)
    # Extract the per-batch diagonal (T, T) blocks of the fused probabilities.
    attn_weights = jnp.stack(
        [aw_full[:, b * T:(b + 1) * T, b * T:(b + 1) * T] for b in range(B)],
        axis=0)                                              # (B, H, T, T)
    return attn_output, attn_weights


@jax.jit
def _siglip_attention_nomask(hidden_states, w_all, b_all):
    return _forward(hidden_states, w_all, b_all, None)


@jax.jit
def _siglip_attention_masked(hidden_states, w_all, b_all, attention_mask):
    return _forward(hidden_states, w_all, b_all, attention_mask)


def siglip_attention(hidden_states, packed_params, attention_mask=None):
    """hidden_states: (B, T, E) float32. Returns (attn_output, attn_weights)."""
    w_all = packed_params["w_all"]
    b_all = packed_params["b_all"]
    if attention_mask is None:
        return _siglip_attention_nomask(hidden_states, w_all, b_all)
    return _siglip_attention_masked(hidden_states, w_all, b_all, attention_mask)


def make_params():
    # The module fills every weight and bias with 1.0 (deterministic).
    ones_w = jnp.ones((EMBED_DIM, EMBED_DIM), dtype=jnp.float32)
    ones_b = jnp.ones((EMBED_DIM,), dtype=jnp.float32)
    return {
        "wq": ones_w, "wk": ones_w, "wv": ones_w, "wo": ones_w,
        "bq": ones_b, "bk": ones_b, "bv": ones_b, "bo": ones_b,
    }


def _reference(hidden_states, params, attention_mask=None):
    # Pure-JAX replica of the PyTorch forward for validation (full-f32 matmuls).
    B, T, E = hidden_states.shape
    P = MM_PRECISION
    q = jnp.matmul(hidden_states, params["wq"].T, precision=P) + params["bq"]
    k = jnp.matmul(hidden_states, params["wk"].T, precision=P) + params["bk"]
    v = jnp.matmul(hidden_states, params["wv"].T, precision=P) + params["bv"]
    q = q.reshape(B, T, NUM_HEADS, HEAD_DIM).transpose(0, 2, 1, 3)
    k = k.reshape(B, T, NUM_HEADS, HEAD_DIM).transpose(0, 2, 1, 3)
    v = v.reshape(B, T, NUM_HEADS, HEAD_DIM).transpose(0, 2, 1, 3)
    w = jnp.einsum("bhqd,bhkd->bhqk", q, k, precision=P) * SCALE
    if attention_mask is not None:
        w = w + attention_mask
    w = jax.nn.softmax(w.astype(jnp.float32), axis=-1)
    o = jnp.einsum("bhqk,bhkd->bhqd", w, v, precision=P)
    o = o.transpose(0, 2, 1, 3).reshape(B, T, E)
    o = jnp.matmul(o, params["wo"].T, precision=P) + params["bo"]
    return o, w


if __name__ == "__main__":
    B, T = 2, 8
    key = jax.random.PRNGKey(0)
    k_x, k_w, k_b, k_m = jax.random.split(key, 4)
    hidden_states = jax.random.normal(k_x, (B, T, EMBED_DIM), dtype=jnp.float32)

    OUT_TOL = dict(rtol=2e-3, atol=1e-2)
    AW_TOL = dict(rtol=2e-3, atol=1e-3)

    # 1) Module-spec params (all ones), no mask — matches the PyTorch module.
    params_ones = make_params()
    packed_ones = pack_siglip_params(params_ones)      # packed ONCE, reused
    attn_out, attn_w = siglip_attention(hidden_states, packed_ones, None)
    jax.block_until_ready((attn_out, attn_w))
    ref_out, ref_w = _reference(hidden_states, params_ones, None)
    assert attn_out.shape == (B, T, EMBED_DIM)
    assert attn_w.shape == (B, NUM_HEADS, T, T)
    assert jnp.allclose(attn_out, ref_out, **OUT_TOL)
    assert jnp.allclose(attn_w, ref_w, **AW_TOL)

    # 2) Random params + additive (B,1,T,T) mask — validates the packed-slab
    #    layout and the masked (fused-bias) code path.
    wkeys = jax.random.split(k_w, 4)
    bkeys = jax.random.split(k_b, 4)
    params_rand = {
        "wq": 0.3 * jax.random.normal(wkeys[0], (EMBED_DIM, EMBED_DIM), jnp.float32),
        "wk": 0.3 * jax.random.normal(wkeys[1], (EMBED_DIM, EMBED_DIM), jnp.float32),
        "wv": 0.3 * jax.random.normal(wkeys[2], (EMBED_DIM, EMBED_DIM), jnp.float32),
        "wo": 0.3 * jax.random.normal(wkeys[3], (EMBED_DIM, EMBED_DIM), jnp.float32),
        "bq": 0.1 * jax.random.normal(bkeys[0], (EMBED_DIM,), jnp.float32),
        "bk": 0.1 * jax.random.normal(bkeys[1], (EMBED_DIM,), jnp.float32),
        "bv": 0.1 * jax.random.normal(bkeys[2], (EMBED_DIM,), jnp.float32),
        "bo": 0.1 * jax.random.normal(bkeys[3], (EMBED_DIM,), jnp.float32),
    }
    packed_rand = pack_siglip_params(params_rand)
    mask = jax.random.normal(k_m, (B, 1, T, T), dtype=jnp.float32)
    attn_out2, attn_w2 = siglip_attention(hidden_states, packed_rand, mask)
    jax.block_until_ready((attn_out2, attn_w2))
    ref_out2, ref_w2 = _reference(hidden_states, params_rand, mask)
    assert jnp.allclose(attn_out2, ref_out2, **OUT_TOL)
    assert jnp.allclose(attn_w2, ref_w2, **AW_TOL)

    print("KERNEL_OK")
</pallas_src>

<mosaic_0001>
module attributes {stable_mosaic.version = 11 : i64} {
  func.func @_siglip_attn_kernel(%arg0: i32, %arg1: memref<16x20xf32, #tpu.memory_space<vmem>>, %arg2: memref<20x80xf32, #tpu.memory_space<vmem>>, %arg3: memref<1x80xf32, #tpu.memory_space<vmem>>, %arg4: memref<16x20xf32, #tpu.memory_space<vmem>>, %arg5: memref<2x16x16xf32, #tpu.memory_space<vmem>>) attributes {dimension_semantics = [#tpu.dimension_semantics<arbitrary>], iteration_bounds = array<i64: 1>, scalar_prefetch = 0 : i64, scratch_operands = 0 : i64, tpu.core_type = #tpu.core_type<tc>, window_params = [{pipeline_mode = #tpu.pipeline_mode<synchronous>, transform_indices = @transform_0, window_bounds = array<i64: 16, 20>}, {pipeline_mode = #tpu.pipeline_mode<synchronous>, transform_indices = @transform_1, window_bounds = array<i64: 20, 80>}, {pipeline_mode = #tpu.pipeline_mode<synchronous>, transform_indices = @transform_2, window_bounds = array<i64: 1, 80>}, {pipeline_mode = #tpu.pipeline_mode<synchronous>, transform_indices = @transform_3, window_bounds = array<i64: 16, 20>}, {pipeline_mode = #tpu.pipeline_mode<synchronous>, transform_indices = @transform_4, window_bounds = array<i64: 2, 16, 16>}]} {
    %c0 = arith.constant 0 : index
    %c0_0 = arith.constant 0 : index
    %0 = vector.load %arg1[%c0, %c0_0] : memref<16x20xf32, #tpu.memory_space<vmem>>, vector<16x20xf32>
    %c0_1 = arith.constant 0 : index
    %c0_2 = arith.constant 0 : index
    %1 = vector.load %arg2[%c0_1, %c0_2] : memref<20x80xf32, #tpu.memory_space<vmem>>, vector<20x80xf32>
    %c0_3 = arith.constant 0 : index
    %c0_4 = arith.constant 0 : index
    %2 = vector.load %arg3[%c0_3, %c0_4] : memref<1x80xf32, #tpu.memory_space<vmem>>, vector<1x80xf32>
    %3 = vector.extract_strided_slice %1 {offsets = [0, 0], sizes = [20, 60], strides = [1, 1]} : vector<20x80xf32> to vector<20x60xf32>
    %cst = arith.constant dense<0.000000e+00> : vector<16x60xf32>
    %4 = tpu.matmul %0, %3, %cst {dimension_numbers = #tpu.dot_dimension_numbers<[1], [0], [0], [1], [0, 0, 1, 1], [], []>, precision = #tpu.contract_precision<fp32>} : vector<16x20xf32>, vector<20x60xf32>, vector<16x60xf32> -> vector<16x60xf32>
    %5 = vector.extract_strided_slice %2 {offsets = [0, 0], sizes = [1, 60], strides = [1, 1]} : vector<1x80xf32> to vector<1x60xf32>
    %6 = vector.broadcast %5 : vector<1x60xf32> to vector<16x60xf32>
    %7 = arith.addf %4, %6 : vector<16x60xf32>
    %8 = tpu.iota {dimensions = array<i32: 0>} : vector<16x16xi32>
    %9 = tpu.iota {dimensions = array<i32: 1>} : vector<16x16xi32>
    %false = arith.constant false
    %10 = vector.broadcast %false : i1 to vector<16x16xi1>
    %c0_i32 = arith.constant 0 : i32
    %11 = vector.broadcast %c0_i32 : i32 to vector<16x16xi32>
    %12 = arith.cmpi sge, %8, %11 : vector<16x16xi32>
    %c8_i32 = arith.constant 8 : i32
    %13 = vector.broadcast %c8_i32 : i32 to vector<16x16xi32>
    %14 = arith.cmpi slt, %8, %13 : vector<16x16xi32>
    %15 = arith.andi %12, %14 : vector<16x16xi1>
    %c0_i32_5 = arith.constant 0 : i32
    %16 = vector.broadcast %c0_i32_5 : i32 to vector<16x16xi32>
    %17 = arith.cmpi sge, %9, %16 : vector<16x16xi32>
    %18 = arith.andi %15, %17 : vector<16x16xi1>
    %c8_i32_6 = arith.constant 8 : i32
    %19 = vector.broadcast %c8_i32_6 : i32 to vector<16x16xi32>
    %20 = arith.cmpi slt, %9, %19 : vector<16x16xi32>
    %21 = arith.andi %18, %20 : vector<16x16xi1>
    %22 = arith.ori %10, %21 : vector<16x16xi1>
    %c8_i32_7 = arith.constant 8 : i32
    %23 = vector.broadcast %c8_i32_7 : i32 to vector<16x16xi32>
    %24 = arith.cmpi sge, %8, %23 : vector<16x16xi32>
    %c16_i32 = arith.constant 16 : i32
    %25 = vector.broadcast %c16_i32 : i32 to vector<16x16xi32>
    %26 = arith.cmpi slt, %8, %25 : vector<16x16xi32>
    %27 = arith.andi %24, %26 : vector<16x16xi1>
    %c8_i32_8 = arith.constant 8 : i32
    %28 = vector.broadcast %c8_i32_8 : i32 to vector<16x16xi32>
    %29 = arith.cmpi sge, %9, %28 : vector<16x16xi32>
    %30 = arith.andi %27, %29 : vector<16x16xi1>
    %c16_i32_9 = arith.constant 16 : i32
    %31 = vector.broadcast %c16_i32_9 : i32 to vector<16x16xi32>
    %32 = arith.cmpi slt, %9, %31 : vector<16x16xi32>
    %33 = arith.andi %30, %32 : vector<16x16xi1>
    %34 = arith.ori %22, %33 : vector<16x16xi1>
    %cst_10 = arith.constant 0.000000e+00 : f32
    %cst_11 = arith.constant -1.000000e+30 : f32
    %35 = vector.broadcast %cst_10 : f32 to vector<16x16xf32>
    %36 = vector.broadcast %cst_11 : f32 to vector<16x16xf32>
    %37 = arith.select %34, %35, %36 : vector<16x16xi1>, vector<16x16xf32>
    %38 = vector.extract_strided_slice %7 {offsets = [0, 0], sizes = [16, 10], strides = [1, 1]} : vector<16x60xf32> to vector<16x10xf32>
    %39 = vector.extract_strided_slice %7 {offsets = [0, 20], sizes = [16, 10], strides = [1, 1]} : vector<16x60xf32> to vector<16x10xf32>
    %40 = vector.extract_strided_slice %7 {offsets = [0, 40], sizes = [16, 10], strides = [1, 1]} : vector<16x60xf32> to vector<16x10xf32>
    %cst_12 = arith.constant dense<0.000000e+00> : vector<16x16xf32>
    %41 = tpu.matmul %38, %39, %cst_12 {dimension_numbers = #tpu.dot_dimension_numbers<[1], [1], [0], [0], [0, 0, 1, 0], [], []>, precision = #tpu.contract_precision<fp32>} : vector<16x10xf32>, vector<16x10xf32>, vector<16x16xf32> -> vector<16x16xf32>
    %cst_13 = arith.constant 0.316227764 : f32
    %42 = vector.broadcast %cst_13 : f32 to vector<16x16xf32>
    %43 = arith.mulf %41, %42 : vector<16x16xf32>
    %44 = arith.addf %43, %37 : vector<16x16xf32>
    %cst_14 = arith.constant dense<0xFF800000> : vector<16xf32>
    %45 = vector.multi_reduction <maximumf>, %44, %cst_14 [1] : vector<16x16xf32> to vector<16xf32>
    %46 = vector.shape_cast %45 : vector<16xf32> to vector<16x1xf32>
    %47 = vector.broadcast %46 : vector<16x1xf32> to vector<16x16xf32>
    %48 = arith.subf %44, %47 : vector<16x16xf32>
    %49 = math.exp %48 : vector<16x16xf32>
    %cst_15 = arith.constant dense<0.000000e+00> : vector<16xf32>
    %50 = vector.multi_reduction <add>, %49, %cst_15 [1] : vector<16x16xf32> to vector<16xf32>
    %51 = vector.shape_cast %50 : vector<16xf32> to vector<16x1xf32>
    %52 = vector.broadcast %51 : vector<16x1xf32> to vector<16x16xf32>
    %53 = arith.divf %49, %52 : vector<16x16xf32>
    %c0_16 = arith.constant 0 : index
    %c0_17 = arith.constant 0 : index
    %c0_18 = arith.constant 0 : index
    %54 = vector.load %arg5[%c0_16, %c0_17, %c0_18] : memref<2x16x16xf32, #tpu.memory_space<vmem>>, vector<1x16x16xf32>
    %55 = vector.shape_cast %54 : vector<1x16x16xf32> to vector<16x16xf32>
    %56 = vector.shape_cast %53 : vector<16x16xf32> to vector<1x16x16xf32>
    tpu.vector_store %arg5[%c0_16, %c0_17, %c0_18], %56 {strides = array<i32>} : memref<2x16x16xf32, #tpu.memory_space<vmem>>, vector<1x16x16xf32>,
    %cst_19 = arith.constant dense<0.000000e+00> : vector<16x10xf32>
    %57 = tpu.matmul %53, %40, %cst_19 {dimension_numbers = #tpu.dot_dimension_numbers<[1], [0], [0], [1], [0, 0, 1, 1], [], []>, precision = #tpu.contract_precision<fp32>} : vector<16x16xf32>, vector<16x10xf32>, vector<16x10xf32> -> vector<16x10xf32>
    %58 = vector.extract_strided_slice %7 {offsets = [0, 10], sizes = [16, 10], strides = [1, 1]} : vector<16x60xf32> to vector<16x10xf32>
    %59 = vector.extract_strided_slice %7 {offsets = [0, 30], sizes = [16, 10], strides = [1, 1]} : vector<16x60xf32> to vector<16x10xf32>
    %60 = vector.extract_strided_slice %7 {offsets = [0, 50], sizes = [16, 10], strides = [1, 1]} : vector<16x60xf32> to vector<16x10xf32>
    %cst_20 = arith.constant dense<0.000000e+00> : vector<16x16xf32>
    %61 = tpu.matmul %58, %59, %cst_20 {dimension_numbers = #tpu.dot_dimension_numbers<[1], [1], [0], [0], [0, 0, 1, 0], [], []>, precision = #tpu.contract_precision<fp32>} : vector<16x10xf32>, vector<16x10xf32>, vector<16x16xf32> -> vector<16x16xf32>
    %cst_21 = arith.constant 0.316227764 : f32
    %62 = vector.broadcast %cst_21 : f32 to vector<16x16xf32>
    %63 = arith.mulf %61, %62 : vector<16x16xf32>
    %64 = arith.addf %63, %37 : vector<16x16xf32>
    %cst_22 = arith.constant dense<0xFF800000> : vector<16xf32>
    %65 = vector.multi_reduction <maximumf>, %64, %cst_22 [1] : vector<16x16xf32> to vector<16xf32>
    %66 = vector.shape_cast %65 : vector<16xf32> to vector<16x1xf32>
    %67 = vector.broadcast %66 : vector<16x1xf32> to vector<16x16xf32>
    %68 = arith.subf %64, %67 : vector<16x16xf32>
    %69 = math.exp %68 : vector<16x16xf32>
    %cst_23 = arith.constant dense<0.000000e+00> : vector<16xf32>
    %70 = vector.multi_reduction <add>, %69, %cst_23 [1] : vector<16x16xf32> to vector<16xf32>
    %71 = vector.shape_cast %70 : vector<16xf32> to vector<16x1xf32>
    %72 = vector.broadcast %71 : vector<16x1xf32> to vector<16x16xf32>
    %73 = arith.divf %69, %72 : vector<16x16xf32>
    %c1 = arith.constant 1 : index
    %c0_24 = arith.constant 0 : index
    %c0_25 = arith.constant 0 : index
    %74 = vector.load %arg5[%c1, %c0_24, %c0_25] : memref<2x16x16xf32, #tpu.memory_space<vmem>>, vector<1x16x16xf32>
    %75 = vector.shape_cast %74 : vector<1x16x16xf32> to vector<16x16xf32>
    %76 = vector.shape_cast %73 : vector<16x16xf32> to vector<1x16x16xf32>
    tpu.vector_store %arg5[%c1, %c0_24, %c0_25], %76 {strides = array<i32>} : memref<2x16x16xf32, #tpu.memory_space<vmem>>, vector<1x16x16xf32>,
    %cst_26 = arith.constant dense<0.000000e+00> : vector<16x10xf32>
    %77 = tpu.matmul %73, %60, %cst_26 {dimension_numbers = #tpu.dot_dimension_numbers<[1], [0], [0], [1], [0, 0, 1, 1], [], []>, precision = #tpu.contract_precision<fp32>} : vector<16x16xf32>, vector<16x10xf32>, vector<16x10xf32> -> vector<16x10xf32>
    %78 = tpu.concatenate %57, %77 in 1 : vector<16x10xf32>, vector<16x10xf32> -> vector<16x20xf32>
    %79 = vector.extract_strided_slice %1 {offsets = [0, 60], sizes = [20, 20], strides = [1, 1]} : vector<20x80xf32> to vector<20x20xf32>
    %cst_27 = arith.constant dense<0.000000e+00> : vector<16x20xf32>
    %80 = tpu.matmul %78, %79, %cst_27 {dimension_numbers = #tpu.dot_dimension_numbers<[1], [0], [0], [1], [0, 0, 1, 1], [], []>, precision = #tpu.contract_precision<fp32>} : vector<16x20xf32>, vector<20x20xf32>, vector<16x20xf32> -> vector<16x20xf32>
    %81 = vector.extract_strided_slice %2 {offsets = [0, 60], sizes = [1, 20], strides = [1, 1]} : vector<1x80xf32> to vector<1x20xf32>
    %82 = vector.broadcast %81 : vector<1x20xf32> to vector<16x20xf32>
    %83 = arith.addf %80, %82 : vector<16x20xf32>
    %c0_28 = arith.constant 0 : index
    %c0_29 = arith.constant 0 : index
    %84 = vector.load %arg4[%c0_28, %c0_29] : memref<16x20xf32, #tpu.memory_space<vmem>>, vector<16x20xf32>
    tpu.vector_store %arg4[%c0_28, %c0_29], %83 {strides = array<i32>} : memref<16x20xf32, #tpu.memory_space<vmem>>, vector<16x20xf32>,
    return
  }
  func.func @transform_0(%arg0: i32) -> (i32, i32) {
    %c0_i32 = arith.constant 0 : i32
    %c0_i32_0 = arith.constant 0 : i32
    %c0_i32_1 = arith.constant 0 : i32
    return %c0_i32, %c0_i32_0 : i32, i32
  }
  func.func @transform_1(%arg0: i32) -> (i32, i32) {
    %c0_i32 = arith.constant 0 : i32
    %c0_i32_0 = arith.constant 0 : i32
    %c0_i32_1 = arith.constant 0 : i32
    return %c0_i32, %c0_i32_0 : i32, i32
  }
  func.func @transform_2(%arg0: i32) -> (i32, i32) {
    %c0_i32 = arith.constant 0 : i32
    %c0_i32_0 = arith.constant 0 : i32
    %c0_i32_1 = arith.constant 0 : i32
    return %c0_i32, %c0_i32_0 : i32, i32
  }
  func.func @transform_3(%arg0: i32) -> (i32, i32) {
    %c0_i32 = arith.constant 0 : i32
    %c0_i32_0 = arith.constant 0 : i32
    %c0_i32_1 = arith.constant 0 : i32
    return %c0_i32, %c0_i32_0 : i32, i32
  }
  func.func @transform_4(%arg0: i32) -> (i32, i32, i32) {
    %c0_i32 = arith.constant 0 : i32
    %c0_i32_0 = arith.constant 0 : i32
    %c0_i32_1 = arith.constant 0 : i32
    %c0_i32_2 = arith.constant 0 : i32
    return %c0_i32, %c0_i32_0, %c0_i32_1 : i32, i32, i32
  }
}

</mosaic_0001>

<llo_original>
// kernel: _siglip_attention_nomask.1
$region0: #{_siglip_attention_nomask.1}
  #allocation0 [shape = 'u32[]', space=smem, size = 0x4, offset = 0x4, fixed_abs, tag = 'smem constant byte address 0x4 - core index']
  #allocation1 [shape = 'u32[72,128]{1,0:T(1,128)}', space=vmem, size = 0x9000, scoped, tag = 'internal scratch']
  %s0 = inlined_call_operand.hbm [shape: f32[16,20], index: 0, kind: input, shape index: {}]
  %s1 = inlined_call_operand.hbm [shape: f32[20,80], index: 1, kind: input, shape index: {}]
  %s2 = inlined_call_operand.vmem [shape: f32[1,80], index: 2, kind: input, shape index: {}]
  %s3 = inlined_call_operand.hbm [shape: f32[16,20], index: 3, kind: output, shape index: {0}]
  %s4 = inlined_call_operand.vmem [shape: f32[2,16,16], index: 4, kind: output, shape index: {1}]
  %5 = xla_tuple %s3, %s4
  %s6 = sld [smem:[#allocation0]]
  $region38: #{_siglip_attention_nomask.1} parent=0
    _
  %s8 = ssub.s32 1, %s6
  %s9 = scalar_select 0, %s8, %s6
  $region1: #{_siglip_attention_nomask.1} parent=0
    #allocation2 [shape = 'u8[8192]{0}', space=vmem, size = 0x2000, scoped, tag = 'input window, operand 0, single buffered']
    #allocation3 [shape = 's32[1]{0}', space=sflag, size = 0x4, scoped, tag = 'scoped memory for _siglip_attention_nomask.1']
    #allocation4 [shape = 's32[1]{0}', space=sflag, size = 0x4, scoped, tag = 'scoped memory for _siglip_attention_nomask.1']
    #allocation5 [shape = 'u8[12288]{0}', space=vmem, size = 0x3000, scoped, tag = 'input window, operand 1, single buffered']
    #allocation6 [shape = 's32[1]{0}', space=sflag, size = 0x4, scoped, tag = 'scoped memory for _siglip_attention_nomask.1']
    #allocation7 [shape = 'u8[8192]{0}', space=vmem, size = 0x2000, scoped, tag = 'output window, operand 0, single buffered']
    %10 = vsyncpa [#allocation3], 0
    %11 = vsyncpa [#allocation6], 0
    %12 = vsyncpa [#allocation4], 0
    // Predicated region
    $region2: #{_siglip_attention_nomask.1} parent=1 // pred_check
      _
    $region3: #{_siglip_attention_nomask.1} parent=1 // pred_check_branch
      %14 = sbr.rel (0) target = $region5
    $region4: #{_siglip_attention_nomask.1} parent=1 // pred_region
      %16 = vsyncadd [#allocation3], 0
      %s17 = sshll.u32 %s0, 4
      %s18 = int_to_ptr.hbm [resolvable:$true] %s17
      %s19 = sshll.u32 [#allocation2], 4
      %s20 = int_to_ptr.vmem [resolvable:$true] %s19
      %25 = dma.hbm_to_vmem [thread:$0]  %s18, 256, %s20, [#allocation3], 128, 128, 8
    $region5: #{_siglip_attention_nomask.1} parent=1 // pred_fallthru
      _
    // Predicated region
    $region6: #{_siglip_attention_nomask.1} parent=1 // pred_check
      _
    $region7: #{_siglip_attention_nomask.1} parent=1 // pred_check_branch
      %27 = sbr.rel (0) target = $region9
    $region8: #{_siglip_attention_nomask.1} parent=1 // pred_region
      %29 = vsyncadd [#allocation6], 0
      %s30 = sshll.u32 %s1, 4
      %s31 = int_to_ptr.hbm [resolvable:$true] %s30
      %s32 = sshll.u32 [#allocation5], 4
      %s33 = int_to_ptr.vmem [resolvable:$true] %s32
      %38 = dma.hbm_to_vmem [thread:$0]  %s31, 384, %s33, [#allocation6], 128, 128, 8
    $region9: #{_siglip_attention_nomask.1} parent=1 // pred_fallthru
      _
    // Predicated region
    $region10: #{_siglip_attention_nomask.1} parent=1 // pred_check
      _
    $region11: #{_siglip_attention_nomask.1} parent=1 // pred_check_branch
      %40 = sbr.rel (0) target = $region13
    $region12: #{_siglip_attention_nomask.1} parent=1 // pred_region
      _
    $region13: #{_siglip_attention_nomask.1} parent=1 // pred_fallthru
      _
    // Predicated region
    $region14: #{_siglip_attention_nomask.1} parent=1 // pred_check
      _
    $region15: #{_siglip_attention_nomask.1} parent=1 // pred_check_branch
      %42 = sbr.rel (0) target = $region17
    $region16: #{_siglip_attention_nomask.1} parent=1 // pred_region
      %44 = dma.done [#allocation3], 256
    $region17: #{_siglip_attention_nomask.1} parent=1 // pred_fallthru
      _
    // Predicated region
    $region18: #{_siglip_attention_nomask.1} parent=1 // pred_check
      _
    $region19: #{_siglip_attention_nomask.1} parent=1 // pred_check_branch
      %46 = sbr.rel (0) target = $region21
    $region20: #{_siglip_attention_nomask.1} parent=1 // pred_region
      %48 = dma.done [#allocation6], 384
    $region21: #{_siglip_attention_nomask.1} parent=1 // pred_fallthru
      _
    %v49 = vld [vmem:[#allocation2] sm:$0xff]
    %v50 = vld [vmem:[#allocation2 + $0x8] sm:$0xff]
    %v51 = vld [vmem:[#allocation5] sm:$0xff]
    %v52 = vld [vmem:[#allocation5 + $0x8] sm:$0xff]
    %v53 = vld [vmem:[#allocation5 + $0x10] sm:$0xf]
    %v54 = vld [vmem:[%s2] sm:$0x1]
    %v56 = vperm.slane %v54, 0
    %vm58 = vcmask 162816
    %v60 = vsel %vm58, %v49, 0
    %v63 = vsel %vm58, %v50, 0
    %vm65 = vcmask 1043456
    %v67 = vsel %vm65, %v53, 0
    %69 = vmatpush.msra.mxu0 0.0
    %70 = vmatpush.msra.mxu0 0.0
    %71 = vmatpush.msra.mxu0 0.0
    %72 = vmatpush.msra.mxu0 0.0
    %73 = vmatpush.msra.mxu0 0.0
    %74 = vmatpush.msra.mxu0 0.0
    %75 = vmatpush.msra.mxu0 0.0
    %76 = vmatpush.msra.mxu0 0.0
    %77 = vmatpush.msra.mxu0 0.0
    %78 = vmatpush.msra.mxu0 0.0
    %79 = vmatpush.msra.mxu0 0.0
    %80 = vmatpush.msra.mxu0 0.0
    %81 = vmatpush.msra.mxu0 0.0
    %v82 = vand.u32 %v67, 4294901760
    %83 = vmatpush.msra.mxu0 %v82
    %v84 = vand.u32 %v52, 4294901760
    %85 = vmatpush.msra.mxu0 %v84
    %v86 = vand.u32 %v51, 4294901760
    %87 = vmatpush.msra.mxu0 %v86
    %v88 = vand.u32 %v60, 4294901760
    %v89 = vsub.f32 %v60, %v88
    %v90 = vand.u32 %v89, 4294901760
    %v91 = vsub.f32 %v89, %v90
    %v92 = vand.u32 %v91, 4294901760
    %93 = vmatmul.f32.gmra.mxu0 %v92
    %v94 = vpop.f32.mrf.mxu0
    %v95 = vadd.f32 %v56, %v94
    %v96 = vand.u32 %v63, 4294901760
    %v97 = vsub.f32 %v63, %v96
    %v98 = vand.u32 %v97, 4294901760
    %v99 = vsub.f32 %v97, %v98
    %v100 = vand.u32 %v99, 4294901760
    %101 = vmatmul.f32.gmra.mxu0 %v100
    %v102 = vpop.f32.mrf.mxu0
    %v103 = vadd.f32 %v56, %v102
    %104 = vdwg.mxu0
    %105 = vmatpush.msra.mxu0 0.0
    %106 = vmatpush.msra.mxu0 0.0
    %107 = vmatpush.msra.mxu0 0.0
    %108 = vmatpush.msra.mxu0 0.0
    %109 = vmatpush.msra.mxu0 0.0
    %110 = vmatpush.msra.mxu0 0.0
    %111 = vmatpush.msra.mxu0 0.0
    %112 = vmatpush.msra.mxu0 0.0
    %113 = vmatpush.msra.mxu0 0.0
    %114 = vmatpush.msra.mxu0 0.0
    %115 = vmatpush.msra.mxu0 0.0
    %116 = vmatpush.msra.mxu0 0.0
    %117 = vmatpush.msra.mxu0 0.0
    %v118 = vand.u32 %v67, 4294901760
    %v119 = vsub.f32 %v67, %v118
    %v120 = vand.u32 %v119, 4294901760
    %v121 = vsub.f32 %v119, %v120
    %v122 = vand.u32 %v121, 4294901760
    %123 = vmatpush.msra.mxu0 %v122
    %v124 = vand.u32 %v52, 4294901760
    %v125 = vsub.f32 %v52, %v124
    %v126 = vand.u32 %v125, 4294901760
    %v127 = vsub.f32 %v125, %v126
    %v128 = vand.u32 %v127, 4294901760
    %129 = vmatpush.msra.mxu0 %v128
    %v130 = vand.u32 %v51, 4294901760
    %v131 = vsub.f32 %v51, %v130
    %v132 = vand.u32 %v131, 4294901760
    %v133 = vsub.f32 %v131, %v132
    %v134 = vand.u32 %v133, 4294901760
    %135 = vmatpush.msra.mxu0 %v134
    %v136 = vand.u32 %v60, 4294901760
    %137 = vmatmul.f32.gmra.mxu0 %v136
    %v138 = vpop.f32.mrf.mxu0
    %v139 = vadd.f32 %v95, %v138
    %v140 = vand.u32 %v63, 4294901760
    %141 = vmatmul.f32.gmra.mxu0 %v140
    %v142 = vpop.f32.mrf.mxu0
    %v143 = vadd.f32 %v103, %v142
    %144 = vdwg.mxu0
    %145 = vmatpush.msra.mxu0 0.0
    %146 = vmatpush.msra.mxu0 0.0
    %147 = vmatpush.msra.mxu0 0.0
    %148 = vmatpush.msra.mxu0 0.0
    %149 = vmatpush.msra.mxu0 0.0
    %150 = vmatpush.msra.mxu0 0.0
    %151 = vmatpush.msra.mxu0 0.0
    %152 = vmatpush.msra.mxu0 0.0
    %153 = vmatpush.msra.mxu0 0.0
    %154 = vmatpush.msra.mxu0 0.0
    %155 = vmatpush.msra.mxu0 0.0
    %156 = vmatpush.msra.mxu0 0.0
    %157 = vmatpush.msra.mxu0 0.0
    %v158 = vand.u32 %v67, 4294901760
    %v159 = vsub.f32 %v67, %v158
    %160 = vmatpush.msra.mxu0 %v159
    %v161 = vand.u32 %v52, 4294901760
    %v162 = vsub.f32 %v52, %v161
    %163 = vmatpush.msra.mxu0 %v162
    %v164 = vand.u32 %v51, 4294901760
    %v165 = vsub.f32 %v51, %v164
    %166 = vmatpush.msra.mxu0 %v165
    %v167 = vand.u32 %v60, 4294901760
    %v168 = vsub.f32 %v60, %v167
    %169 = vmatmul.f32.gmra.mxu0 %v168
    %v170 = vpop.f32.mrf.mxu0
    %v171 = vadd.f32 %v139, %v170
    %v172 = vand.u32 %v63, 4294901760
    %v173 = vsub.f32 %v63, %v172
    %174 = vmatmul.f32.gmra.mxu0 %v173
    %v175 = vpop.f32.mrf.mxu0
    %v176 = vadd.f32 %v143, %v175
    %177 = vdwg.mxu0
    %178 = vmatpush.msra.mxu0 0.0
    %179 = vmatpush.msra.mxu0 0.0
    %180 = vmatpush.msra.mxu0 0.0
    %181 = vmatpush.msra.mxu0 0.0
    %182 = vmatpush.msra.mxu0 0.0
    %183 = vmatpush.msra.mxu0 0.0
    %184 = vmatpush.msra.mxu0 0.0
    %185 = vmatpush.msra.mxu0 0.0
    %186 = vmatpush.msra.mxu0 0.0
    %187 = vmatpush.msra.mxu0 0.0
    %188 = vmatpush.msra.mxu0 0.0
    %189 = vmatpush.msra.mxu0 0.0
    %190 = vmatpush.msra.mxu0 0.0
    %v191 = vand.u32 %v67, 4294901760
    %192 = vmatpush.msra.mxu0 %v191
    %v193 = vand.u32 %v52, 4294901760
    %194 = vmatpush.msra.mxu0 %v193
    %v195 = vand.u32 %v51, 4294901760
    %196 = vmatpush.msra.mxu0 %v195
    %v197 = vand.u32 %v60, 4294901760
    %v198 = vsub.f32 %v60, %v197
    %v199 = vand.u32 %v198, 4294901760
    %200 = vmatmul.f32.gmra.mxu0 %v199
    %v201 = vpop.f32.mrf.mxu0
    %v202 = vadd.f32 %v171, %v201
    %v203 = vand.u32 %v63, 4294901760
    %v204 = vsub.f32 %v63, %v203
    %v205 = vand.u32 %v204, 4294901760
    %206 = vmatmul.f32.gmra.mxu0 %v205
    %v207 = vpop.f32.mrf.mxu0
    %v208 = vadd.f32 %v176, %v207
    %209 = vdwg.mxu0
    %210 = vmatpush.msra.mxu0 0.0
    %211 = vmatpush.msra.mxu0 0.0
    %212 = vmatpush.msra.mxu0 0.0
    %213 = vmatpush.msra.mxu0 0.0
    %214 = vmatpush.msra.mxu0 0.0
    %215 = vmatpush.msra.mxu0 0.0
    %216 = vmatpush.msra.mxu0 0.0
    %217 = vmatpush.msra.mxu0 0.0
    %218 = vmatpush.msra.mxu0 0.0
    %219 = vmatpush.msra.mxu0 0.0
    %220 = vmatpush.msra.mxu0 0.0
    %221 = vmatpush.msra.mxu0 0.0
    %222 = vmatpush.msra.mxu0 0.0
    %v223 = vand.u32 %v67, 4294901760
    %v224 = vsub.f32 %v67, %v223
    %v225 = vand.u32 %v224, 4294901760
    %226 = vmatpush.msra.mxu0 %v225
    %v227 = vand.u32 %v52, 4294901760
    %v228 = vsub.f32 %v52, %v227
    %v229 = vand.u32 %v228, 4294901760
    %230 = vmatpush.msra.mxu0 %v229
    %v231 = vand.u32 %v51, 4294901760
    %v232 = vsub.f32 %v51, %v231
    %v233 = vand.u32 %v232, 4294901760
    %234 = vmatpush.msra.mxu0 %v233
    %v235 = vand.u32 %v60, 4294901760
    %236 = vmatmul.f32.gmra.mxu0 %v235
    %v237 = vpop.f32.mrf.mxu0
    %v238 = vadd.f32 %v202, %v237
    %v239 = vand.u32 %v63, 4294901760
    %240 = vmatmul.f32.gmra.mxu0 %v239
    %v241 = vpop.f32.mrf.mxu0
    %v242 = vadd.f32 %v208, %v241
    %243 = vdwg.mxu0
    %244 = vmatpush.msra.mxu0 0.0
    %245 = vmatpush.msra.mxu0 0.0
    %246 = vmatpush.msra.mxu0 0.0
    %247 = vmatpush.msra.mxu0 0.0
    %248 = vmatpush.msra.mxu0 0.0
    %249 = vmatpush.msra.mxu0 0.0
    %250 = vmatpush.msra.mxu0 0.0
    %251 = vmatpush.msra.mxu0 0.0
    %252 = vmatpush.msra.mxu0 0.0
    %253 = vmatpush.msra.mxu0 0.0
    %254 = vmatpush.msra.mxu0 0.0
    %255 = vmatpush.msra.mxu0 0.0
    %256 = vmatpush.msra.mxu0 0.0
    %v257 = vand.u32 %v67, 4294901760
    %258 = vmatpush.msra.mxu0 %v257
    %v259 = vand.u32 %v52, 4294901760
    %260 = vmatpush.msra.mxu0 %v259
    %v261 = vand.u32 %v51, 4294901760
    %262 = vmatpush.msra.mxu0 %v261
    %v263 = vand.u32 %v60, 4294901760
    %264 = vmatmul.f32.gmra.mxu0 %v263
    %v265 = vpop.f32.mrf.mxu0
    %v266 = vadd.f32 %v238, %v265
    %v267 = vand.u32 %v63, 4294901760
    %268 = vmatmul.f32.gmra.mxu0 %v267
    %v269 = vpop.f32.mrf.mxu0
    %v270 = vadd.f32 %v242, %v269
    %271 = vdwg.mxu0
    %v272 = vlaneseq
    %v273 = vshrl.u32 %v272, 7
    %v274 = vadd.s32 %v273, 8
    %v275 = vlaneseq
    %v276 = vand.u32 %v275, 127
    %vm277 = vcmp.ge.s32.totalorder %v273, 0
    %vm278 = vcmp.ge.s32.totalorder %v274, 0
    %vm279 = vcmp.lt.s32.totalorder %v273, 8
    %vm280 = vcmp.lt.s32.totalorder %v274, 8
    %vm281 = vmand %vm277, %vm279
    %vm282 = vmand %vm278, %vm280
    %vm283 = vcmp.ge.s32.totalorder %v276, 0
    %vm284 = vmand %vm281, %vm283
    %vm285 = vmand %vm282, %vm283
    %vm286 = vcmp.lt.s32.totalorder %v276, 8
    %vm287 = vmand %vm284, %vm286
    %vm288 = vmand %vm285, %vm286
    %vm289 = vcmp.ge.s32.totalorder %v273, 8
    %vm290 = vcmp.ge.s32.totalorder %v274, 8
    %vm291 = vcmp.lt.s32.totalorder %v273, 16
    %vm292 = vcmp.lt.s32.totalorder %v274, 16
    %vm293 = vmand %vm289, %vm291
    %vm294 = vmand %vm290, %vm292
    %vm295 = vcmp.ge.s32.totalorder %v276, 8
    %vm296 = vmand %vm293, %vm295
    %vm297 = vmand %vm294, %vm295
    %vm298 = vcmp.lt.s32.totalorder %v276, 16
    %vm299 = vmand %vm296, %vm298
    %vm300 = vmand %vm297, %vm298
    %vm301 = vmor %vm287, %vm299
    %vm302 = vmor %vm288, %vm300
    %v303 = vsel %vm301, 0.0, -1e+30
    %v304 = vsel %vm302, 0.0, -1e+30
    %307 = vrot.lane.b32.xlu0 %v266, 108
    %v308 = vpop.permute.xlu0 %307
    %309 = vrot.lane.b32.xlu0 %v270, 108
    %v310 = vpop.permute.xlu0 %309
    %vm311 = vcmask 80896
    %v312 = vsel %vm311, %v266, 0
    %v314 = vsel %vm311, %v270, 0
    %v316 = vsel %vm311, %v308, 0
    %v318 = vsel %vm311, %v310, 0
    %320 = vmatpush.xpose.msra.mxu0 0.0
    %321 = vmatpush.xpose.msra.mxu0 0.0
    %322 = vmatpush.xpose.msra.mxu0 0.0
    %323 = vmatpush.xpose.msra.mxu0 0.0
    %324 = vmatpush.xpose.msra.mxu0 0.0
    %325 = vmatpush.xpose.msra.mxu0 0.0
    %326 = vmatpush.xpose.msra.mxu0 0.0
    %327 = vmatpush.xpose.msra.mxu0 0.0
    %328 = vmatpush.xpose.msra.mxu0 0.0
    %329 = vmatpush.xpose.msra.mxu0 0.0
    %330 = vmatpush.xpose.msra.mxu0 0.0
    %331 = vmatpush.xpose.msra.mxu0 0.0
    %332 = vmatpush.xpose.msra.mxu0 0.0
    %333 = vmatpush.xpose.msra.mxu0 0.0
    %v334 = vand.u32 %v318, 4294901760
    %335 = vmatpush.xpose.msra.mxu0 %v334
    %v336 = vand.u32 %v316, 4294901760
    %337 = vmatpush.xpose.msra.mxu0 %v336
    %v338 = vand.u32 %v312, 4294901760
    %v339 = vsub.f32 %v312, %v338
    %v340 = vand.u32 %v339, 4294901760
    %v341 = vsub.f32 %v339, %v340
    %v342 = vand.u32 %v341, 4294901760
    %343 = vmatmul.f32.gmra.mxu0 %v342
    %v344 = vpop.f32.mrf.mxu0
    %v345 = vadd.f32 0.0, %v344
    %v346 = vand.u32 %v314, 4294901760
    %v347 = vsub.f32 %v314, %v346
    %v348 = vand.u32 %v347, 4294901760
    %v349 = vsub.f32 %v347, %v348
    %v350 = vand.u32 %v349, 4294901760
    %351 = vmatmul.f32.gmra.mxu0 %v350
    %v352 = vpop.f32.mrf.mxu0
    %v353 = vadd.f32 0.0, %v352
    %354 = vdwg.mxu0
    %355 = vmatpush.xpose.msra.mxu0 0.0
    %356 = vmatpush.xpose.msra.mxu0 0.0
    %357 = vmatpush.xpose.msra.mxu0 0.0
    %358 = vmatpush.xpose.msra.mxu0 0.0
    %359 = vmatpush.xpose.msra.mxu0 0.0
    %360 = vmatpush.xpose.msra.mxu0 0.0
    %361 = vmatpush.xpose.msra.mxu0 0.0
    %362 = vmatpush.xpose.msra.mxu0 0.0
    %363 = vmatpush.xpose.msra.mxu0 0.0
    %364 = vmatpush.xpose.msra.mxu0 0.0
    %365 = vmatpush.xpose.msra.mxu0 0.0
    %366 = vmatpush.xpose.msra.mxu0 0.0
    %367 = vmatpush.xpose.msra.mxu0 0.0
    %368 = vmatpush.xpose.msra.mxu0 0.0
    %v369 = vand.u32 %v318, 4294901760
    %v370 = vsub.f32 %v318, %v369
    %v371 = vand.u32 %v370, 4294901760
    %v372 = vsub.f32 %v370, %v371
    %v373 = vand.u32 %v372, 4294901760
    %374 = vmatpush.xpose.msra.mxu0 %v373
    %v375 = vand.u32 %v316, 4294901760
    %v376 = vsub.f32 %v316, %v375
    %v377 = vand.u32 %v376, 4294901760
    %v378 = vsub.f32 %v376, %v377
    %v379 = vand.u32 %v378, 4294901760
    %380 = vmatpush.xpose.msra.mxu0 %v379
    %v381 = vand.u32 %v312, 4294901760
    %382 = vmatmul.f32.gmra.mxu0 %v381
    %v383 = vpop.f32.mrf.mxu0
    %v384 = vadd.f32 %v345, %v383
    %v385 = vand.u32 %v314, 4294901760
    %386 = vmatmul.f32.gmra.mxu0 %v385
    %v387 = vpop.f32.mrf.mxu0
    %v388 = vadd.f32 %v353, %v387
    %389 = vdwg.mxu0
    %390 = vmatpush.xpose.msra.mxu0 0.0
    %391 = vmatpush.xpose.msra.mxu0 0.0
    %392 = vmatpush.xpose.msra.mxu0 0.0
    %393 = vmatpush.xpose.msra.mxu0 0.0
    %394 = vmatpush.xpose.msra.mxu0 0.0
    %395 = vmatpush.xpose.msra.mxu0 0.0
    %396 = vmatpush.xpose.msra.mxu0 0.0
    %397 = vmatpush.xpose.msra.mxu0 0.0
    %398 = vmatpush.xpose.msra.mxu0 0.0
    %399 = vmatpush.xpose.msra.mxu0 0.0
    %400 = vmatpush.xpose.msra.mxu0 0.0
    %401 = vmatpush.xpose.msra.mxu0 0.0
    %402 = vmatpush.xpose.msra.mxu0 0.0
    %403 = vmatpush.xpose.msra.mxu0 0.0
    %v404 = vand.u32 %v318, 4294901760
    %v405 = vsub.f32 %v318, %v404
    %406 = vmatpush.xpose.msra.mxu0 %v405
    %v407 = vand.u32 %v316, 4294901760
    %v408 = vsub.f32 %v316, %v407
    %409 = vmatpush.xpose.msra.mxu0 %v408
    %v410 = vand.u32 %v312, 4294901760
    %v411 = vsub.f32 %v312, %v410
    %412 = vmatmul.f32.gmra.mxu0 %v411
    %v413 = vpop.f32.mrf.mxu0
    %v414 = vadd.f32 %v384, %v413
    %v415 = vand.u32 %v314, 4294901760
    %v416 = vsub.f32 %v314, %v415
    %417 = vmatmul.f32.gmra.mxu0 %v416
    %v418 = vpop.f32.mrf.mxu0
    %v419 = vadd.f32 %v388, %v418
    %420 = vdwg.mxu0
    %421 = vmatpush.xpose.msra.mxu0 0.0
    %422 = vmatpush.xpose.msra.mxu0 0.0
    %423 = vmatpush.xpose.msra.mxu0 0.0
    %424 = vmatpush.xpose.msra.mxu0 0.0
    %425 = vmatpush.xpose.msra.mxu0 0.0
    %426 = vmatpush.xpose.msra.mxu0 0.0
    %427 = vmatpush.xpose.msra.mxu0 0.0
    %428 = vmatpush.xpose.msra.mxu0 0.0
    %429 = vmatpush.xpose.msra.mxu0 0.0
    %430 = vmatpush.xpose.msra.mxu0 0.0
    %431 = vmatpush.xpose.msra.mxu0 0.0
    %432 = vmatpush.xpose.msra.mxu0 0.0
    %433 = vmatpush.xpose.msra.mxu0 0.0
    %434 = vmatpush.xpose.msra.mxu0 0.0
    %v435 = vand.u32 %v318, 4294901760
    %436 = vmatpush.xpose.msra.mxu0 %v435
    %v437 = vand.u32 %v316, 4294901760
    %438 = vmatpush.xpose.msra.mxu0 %v437
    %v439 = vand.u32 %v312, 4294901760
    %v440 = vsub.f32 %v312, %v439
    %v441 = vand.u32 %v440, 4294901760
    %442 = vmatmul.f32.gmra.mxu0 %v441
    %v443 = vpop.f32.mrf.mxu0
    %v444 = vadd.f32 %v414, %v443
    %v445 = vand.u32 %v314, 4294901760
    %v446 = vsub.f32 %v314, %v445
    %v447 = vand.u32 %v446, 4294901760
    %448 = vmatmul.f32.gmra.mxu0 %v447
    %v449 = vpop.f32.mrf.mxu0
    %v450 = vadd.f32 %v419, %v449
    %451 = vdwg.mxu0
    %452 = vmatpush.xpose.msra.mxu0 0.0
    %453 = vmatpush.xpose.msra.mxu0 0.0
    %454 = vmatpush.xpose.msra.mxu0 0.0
    %455 = vmatpush.xpose.msra.mxu0 0.0
    %456 = vmatpush.xpose.msra.mxu0 0.0
    %457 = vmatpush.xpose.msra.mxu0 0.0
    %458 = vmatpush.xpose.msra.mxu0 0.0
    %459 = vmatpush.xpose.msra.mxu0 0.0
    %460 = vmatpush.xpose.msra.mxu0 0.0
    %461 = vmatpush.xpose.msra.mxu0 0.0
    %462 = vmatpush.xpose.msra.mxu0 0.0
    %463 = vmatpush.xpose.msra.mxu0 0.0
    %464 = vmatpush.xpose.msra.mxu0 0.0
    %465 = vmatpush.xpose.msra.mxu0 0.0
    %v466 = vand.u32 %v318, 4294901760
    %v467 = vsub.f32 %v318, %v466
    %v468 = vand.u32 %v467, 4294901760
    %469 = vmatpush.xpose.msra.mxu0 %v468
    %v470 = vand.u32 %v316, 4294901760
    %v471 = vsub.f32 %v316, %v470
    %v472 = vand.u32 %v471, 4294901760
    %473 = vmatpush.xpose.msra.mxu0 %v472
    %v474 = vand.u32 %v312, 4294901760
    %475 = vmatmul.f32.gmra.mxu0 %v474
    %v476 = vpop.f32.mrf.mxu0
    %v477 = vadd.f32 %v444, %v476
    %v478 = vand.u32 %v314, 4294901760
    %479 = vmatmul.f32.gmra.mxu0 %v478
    %v480 = vpop.f32.mrf.mxu0
    %v481 = vadd.f32 %v450, %v480
    %482 = vdwg.mxu0
    %483 = vmatpush.xpose.msra.mxu0 0.0
    %484 = vmatpush.xpose.msra.mxu0 0.0
    %485 = vmatpush.xpose.msra.mxu0 0.0
    %486 = vmatpush.xpose.msra.mxu0 0.0
    %487 = vmatpush.xpose.msra.mxu0 0.0
    %488 = vmatpush.xpose.msra.mxu0 0.0
    %489 = vmatpush.xpose.msra.mxu0 0.0
    %490 = vmatpush.xpose.msra.mxu0 0.0
    %491 = vmatpush.xpose.msra.mxu0 0.0
    %492 = vmatpush.xpose.msra.mxu0 0.0
    %493 = vmatpush.xpose.msra.mxu0 0.0
    %494 = vmatpush.xpose.msra.mxu0 0.0
    %495 = vmatpush.xpose.msra.mxu0 0.0
    %496 = vmatpush.xpose.msra.mxu0 0.0
    %v497 = vand.u32 %v318, 4294901760
    %498 = vmatpush.xpose.msra.mxu0 %v497
    %v499 = vand.u32 %v316, 4294901760
    %500 = vmatpush.xpose.msra.mxu0 %v499
    %v501 = vand.u32 %v312, 4294901760
    %502 = vmatmul.f32.gmra.mxu0 %v501
    %v503 = vpop.f32.mrf.mxu0
    %v504 = vadd.f32 %v477, %v503
    %v505 = vand.u32 %v314, 4294901760
    %506 = vmatmul.f32.gmra.mxu0 %v505
    %v507 = vpop.f32.mrf.mxu0
    %v508 = vadd.f32 %v481, %v507
    %509 = vdwg.mxu0
    %v510 = vmul.f32 %v504, 0.31622776
    %v511 = vmul.f32 %v508, 0.31622776
    %v512 = vadd.f32 %v510, %v303
    %v513 = vadd.f32 %v511, %v304
    %vm514 = vcmask 130048
    %v515 = vsel %vm514, %v512, -inf
    %516 = vmax.xlane.f32.xlu0 %v515
    %v517 = vpop.xlane.xlu0 %516
    %v518 = vsel %vm514, %v513, -inf
    %519 = vmax.xlane.f32.xlu0 %v518
    %v520 = vpop.xlane.xlu0 %519
    %v521 = vsub.f32 %v512, %v517
    %v522 = vsub.f32 %v513, %v520
    %v523 = vmul.f32 %v521, 1.442695
    %v524 = vpow.pop %v523
    %v525 = vmul.f32 %v522, 1.442695
    %v526 = vpow.pop %v525
    %v527 = vsel %vm514, %v524, 0.0
    %528 = vadd.xlane.f32.xlu0 %v527
    %v529 = vpop.xlane.xlu0 %528
    %v530 = vsel %vm514, %v526, 0.0
    %531 = vadd.xlane.f32.xlu0 %v530
    %v532 = vpop.xlane.xlu0 %531
    %v533 = vrcp.pop %v529
    %v534 = vmul.f32 %v529, %v533
    %v535 = vsub.f32 1.0, %v534
    %v536 = vmul.f32 %v533, %v535
    %v537 = vadd.f32 %v533, %v536
    %vm538 = vweird.f32 %v529
    %vm539 = vweird.f32 %v533
    %vm540 = vmor %vm538, %vm539
    %v541 = vsel %vm540, %v533, %v537
    %v542 = vand.u32 2147483647, %v529
    %vm543 = vcmp.eq.f32.partialorder %v542, 8.507059e+37
    %v544 = vand.u32 %v529, 2147483648
    %v545 = vor.u32 1.1754944e-38, %v544
    %v546 = vsel %vm543, %v545, %v541
    %v547 = vmul.f32 %v524, %v546
    %v548 = vrcp.pop %v532
    %v549 = vmul.f32 %v532, %v548
    %v550 = vsub.f32 1.0, %v549
    %v551 = vmul.f32 %v548, %v550
    %v552 = vadd.f32 %v548, %v551
    %vm553 = vweird.f32 %v532
    %vm554 = vweird.f32 %v548
    %vm555 = vmor %vm553, %vm554
    %v556 = vsel %vm555, %v548, %v552
    %v557 = vand.u32 2147483647, %v532
    %vm558 = vcmp.eq.f32.partialorder %v557, 8.507059e+37
    %v559 = vand.u32 %v532, 2147483648
    %v560 = vor.u32 1.1754944e-38, %v559
    %v561 = vsel %vm558, %v560, %v556
    %v562 = vmul.f32 %v526, %v561
    %563 = vst.msk [vmem:[%s4] sm:$0xff] %vm514, %v547
    %564 = vst.msk [vmem:[%s4 + $0x8] sm:$0xff] %vm514, %v562
    %565 = vrot.lane.b32.xlu0 %v266, 88
    %v566 = vpop.permute.xlu0 %565
    %567 = vrot.lane.b32.xlu0 %v270, 88
    %v568 = vpop.permute.xlu0 %567
    %v572 = vsel %vm514, %v547, 0
    %v575 = vsel %vm514, %v562, 0
    %577 = vmatpush.msra.mxu0 0.0
    %578 = vmatpush.msra.mxu0 0.0
    %579 = vmatpush.msra.mxu0 0.0
    %580 = vmatpush.msra.mxu0 0.0
    %581 = vmatpush.msra.mxu0 0.0
    %582 = vmatpush.msra.mxu0 0.0
    %583 = vmatpush.msra.mxu0 0.0
    %584 = vmatpush.msra.mxu0 0.0
    %585 = vmatpush.msra.mxu0 0.0
    %586 = vmatpush.msra.mxu0 0.0
    %587 = vmatpush.msra.mxu0 0.0
    %588 = vmatpush.msra.mxu0 0.0
    %589 = vmatpush.msra.mxu0 0.0
    %590 = vmatpush.msra.mxu0 0.0
    %v591 = vand.u32 %v568, 4294901760
    %592 = vmatpush.msra.mxu0 %v591
    %v593 = vand.u32 %v566, 4294901760
    %594 = vmatpush.msra.mxu0 %v593
    %v595 = vand.u32 %v572, 4294901760
    %v596 = vsub.f32 %v572, %v595
    %v597 = vand.u32 %v596, 4294901760
    %v598 = vsub.f32 %v596, %v597
    %v599 = vand.u32 %v598, 4294901760
    %600 = vmatmul.f32.gmra.mxu0 %v599
    %v601 = vpop.f32.mrf.mxu0
    %v602 = vadd.f32 0.0, %v601
    %v603 = vand.u32 %v575, 4294901760
    %v604 = vsub.f32 %v575, %v603
    %v605 = vand.u32 %v604, 4294901760
    %v606 = vsub.f32 %v604, %v605
    %v607 = vand.u32 %v606, 4294901760
    %608 = vmatmul.f32.gmra.mxu0 %v607
    %v609 = vpop.f32.mrf.mxu0
    %v610 = vadd.f32 0.0, %v609
    %611 = vdwg.mxu0
    %612 = vmatpush.msra.mxu0 0.0
    %613 = vmatpush.msra.mxu0 0.0
    %614 = vmatpush.msra.mxu0 0.0
    %615 = vmatpush.msra.mxu0 0.0
    %616 = vmatpush.msra.mxu0 0.0
    %617 = vmatpush.msra.mxu0 0.0
    %618 = vmatpush.msra.mxu0 0.0
    %619 = vmatpush.msra.mxu0 0.0
    %620 = vmatpush.msra.mxu0 0.0
    %621 = vmatpush.msra.mxu0 0.0
    %622 = vmatpush.msra.mxu0 0.0
    %623 = vmatpush.msra.mxu0 0.0
    %624 = vmatpush.msra.mxu0 0.0
    %625 = vmatpush.msra.mxu0 0.0
    %v626 = vand.u32 %v568, 4294901760
    %v627 = vsub.f32 %v568, %v626
    %v628 = vand.u32 %v627, 4294901760
    %v629 = vsub.f32 %v627, %v628
    %v630 = vand.u32 %v629, 4294901760
    %631 = vmatpush.msra.mxu0 %v630
    %v632 = vand.u32 %v566, 4294901760
    %v633 = vsub.f32 %v566, %v632
    %v634 = vand.u32 %v633, 4294901760
    %v635 = vsub.f32 %v633, %v634
    %v636 = vand.u32 %v635, 4294901760
    %637 = vmatpush.msra.mxu0 %v636
    %v638 = vand.u32 %v572, 4294901760
    %639 = vmatmul.f32.gmra.mxu0 %v638
    %v640 = vpop.f32.mrf.mxu0
    %v641 = vadd.f32 %v602, %v640
    %v642 = vand.u32 %v575, 4294901760
    %643 = vmatmul.f32.gmra.mxu0 %v642
    %v644 = vpop.f32.mrf.mxu0
    %v645 = vadd.f32 %v610, %v644
    %646 = vdwg.mxu0
    %647 = vmatpush.msra.mxu0 0.0
    %648 = vmatpush.msra.mxu0 0.0
    %649 = vmatpush.msra.mxu0 0.0
    %650 = vmatpush.msra.mxu0 0.0
    %651 = vmatpush.msra.mxu0 0.0
    %652 = vmatpush.msra.mxu0 0.0
    %653 = vmatpush.msra.mxu0 0.0
    %654 = vmatpush.msra.mxu0 0.0
    %655 = vmatpush.msra.mxu0 0.0
    %656 = vmatpush.msra.mxu0 0.0
    %657 = vmatpush.msra.mxu0 0.0
    %658 = vmatpush.msra.mxu0 0.0
    %659 = vmatpush.msra.mxu0 0.0
    %660 = vmatpush.msra.mxu0 0.0
    %v661 = vand.u32 %v568, 4294901760
    %v662 = vsub.f32 %v568, %v661
    %663 = vmatpush.msra.mxu0 %v662
    %v664 = vand.u32 %v566, 4294901760
    %v665 = vsub.f32 %v566, %v664
    %666 = vmatpush.msra.mxu0 %v665
    %v667 = vand.u32 %v572, 4294901760
    %v668 = vsub.f32 %v572, %v667
    %669 = vmatmul.f32.gmra.mxu0 %v668
    %v670 = vpop.f32.mrf.mxu0
    %v671 = vadd.f32 %v641, %v670
    %v672 = vand.u32 %v575, 4294901760
    %v673 = vsub.f32 %v575, %v672
    %674 = vmatmul.f32.gmra.mxu0 %v673
    %v675 = vpop.f32.mrf.mxu0
    %v676 = vadd.f32 %v645, %v675
    %677 = vdwg.mxu0
    %678 = vmatpush.msra.mxu0 0.0
    %679 = vmatpush.msra.mxu0 0.0
    %680 = vmatpush.msra.mxu0 0.0
    %681 = vmatpush.msra.mxu0 0.0
    %682 = vmatpush.msra.mxu0 0.0
    %683 = vmatpush.msra.mxu0 0.0
    %684 = vmatpush.msra.mxu0 0.0
    %685 = vmatpush.msra.mxu0 0.0
    %686 = vmatpush.msra.mxu0 0.0
    %687 = vmatpush.msra.mxu0 0.0
    %688 = vmatpush.msra.mxu0 0.0
    %689 = vmatpush.msra.mxu0 0.0
    %690 = vmatpush.msra.mxu0 0.0
    %691 = vmatpush.msra.mxu0 0.0
    %v692 = vand.u32 %v568, 4294901760
    %693 = vmatpush.msra.mxu0 %v692
    %v694 = vand.u32 %v566, 4294901760
    %695 = vmatpush.msra.mxu0 %v694
    %v696 = vand.u32 %v572, 4294901760
    %v697 = vsub.f32 %v572, %v696
    %v698 = vand.u32 %v697, 4294901760
    %699 = vmatmul.f32.gmra.mxu0 %v698
    %v700 = vpop.f32.mrf.mxu0
    %v701 = vadd.f32 %v671, %v700
    %v702 = vand.u32 %v575, 4294901760
    %v703 = vsub.f32 %v575, %v702
    %v704 = vand.u32 %v703, 4294901760
    %705 = vmatmul.f32.gmra.mxu0 %v704
    %v706 = vpop.f32.mrf.mxu0
    %v707 = vadd.f32 %v676, %v706
    %708 = vdwg.mxu0
    %709 = vmatpush.msra.mxu0 0.0
    %710 = vmatpush.msra.mxu0 0.0
    %711 = vmatpush.msra.mxu0 0.0
    %712 = vmatpush.msra.mxu0 0.0
    %713 = vmatpush.msra.mxu0 0.0
    %714 = vmatpush.msra.mxu0 0.0
    %715 = vmatpush.msra.mxu0 0.0
    %716 = vmatpush.msra.mxu0 0.0
    %717 = vmatpush.msra.mxu0 0.0
    %718 = vmatpush.msra.mxu0 0.0
    %719 = vmatpush.msra.mxu0 0.0
    %720 = vmatpush.msra.mxu0 0.0
    %721 = vmatpush.msra.mxu0 0.0
    %722 = vmatpush.msra.mxu0 0.0
    %v723 = vand.u32 %v568, 4294901760
    %v724 = vsub.f32 %v568, %v723
    %v725 = vand.u32 %v724, 4294901760
    %726 = vmatpush.msra.mxu0 %v725
    %v727 = vand.u32 %v566, 4294901760
    %v728 = vsub.f32 %v566, %v727
    %v729 = vand.u32 %v728, 4294901760
    %730 = vmatpush.msra.mxu0 %v729
    %v731 = vand.u32 %v572, 4294901760
    %732 = vmatmul.f32.gmra.mxu0 %v731
    %v733 = vpop.f32.mrf.mxu0
    %v734 = vadd.f32 %v701, %v733
    %v735 = vand.u32 %v575, 4294901760
    %736 = vmatmul.f32.gmra.mxu0 %v735
    %v737 = vpop.f32.mrf.mxu0
    %v738 = vadd.f32 %v707, %v737
    %739 = vdwg.mxu0
    %740 = vmatpush.msra.mxu0 0.0
    %741 = vmatpush.msra.mxu0 0.0
    %742 = vmatpush.msra.mxu0 0.0
    %743 = vmatpush.msra.mxu0 0.0
    %744 = vmatpush.msra.mxu0 0.0
    %745 = vmatpush.msra.mxu0 0.0
    %746 = vmatpush.msra.mxu0 0.0
    %747 = vmatpush.msra.mxu0 0.0
    %748 = vmatpush.msra.mxu0 0.0
    %749 = vmatpush.msra.mxu0 0.0
    %750 = vmatpush.msra.mxu0 0.0
    %751 = vmatpush.msra.mxu0 0.0
    %752 = vmatpush.msra.mxu0 0.0
    %753 = vmatpush.msra.mxu0 0.0
    %v754 = vand.u32 %v568, 4294901760
    %755 = vmatpush.msra.mxu0 %v754
    %v756 = vand.u32 %v566, 4294901760
    %757 = vmatpush.msra.mxu0 %v756
    %v758 = vand.u32 %v572, 4294901760
    %759 = vmatmul.f32.gmra.mxu0 %v758
    %v760 = vpop.f32.mrf.mxu0
    %v761 = vadd.f32 %v734, %v760
    %v762 = vand.u32 %v575, 4294901760
    %763 = vmatmul.f32.gmra.mxu0 %v762
    %v764 = vpop.f32.mrf.mxu0
    %v765 = vadd.f32 %v738, %v764
    %766 = vdwg.mxu0
    %767 = vrot.lane.b32.xlu0 %v266, 118
    %v768 = vpop.permute.xlu0 %767
    %769 = vrot.lane.b32.xlu0 %v270, 118
    %v770 = vpop.permute.xlu0 %769
    %771 = vrot.lane.b32.xlu0 %v266, 98
    %v772 = vpop.permute.xlu0 %771
    %773 = vrot.lane.b32.xlu0 %v270, 98
    %v774 = vpop.permute.xlu0 %773
    %v775 = vsel %vm311, %v768, 0
    %v777 = vsel %vm311, %v770, 0
    %v779 = vsel %vm311, %v772, 0
    %v781 = vsel %vm311, %v774, 0
    %783 = vmatpush.xpose.msra.mxu0 0.0
    %784 = vmatpush.xpose.msra.mxu0 0.0
    %785 = vmatpush.xpose.msra.mxu0 0.0
    %786 = vmatpush.xpose.msra.mxu0 0.0
    %787 = vmatpush.xpose.msra.mxu0 0.0
    %788 = vmatpush.xpose.msra.mxu0 0.0
    %789 = vmatpush.xpose.msra.mxu0 0.0
    %790 = vmatpush.xpose.msra.mxu0 0.0
    %791 = vmatpush.xpose.msra.mxu0 0.0
    %792 = vmatpush.xpose.msra.mxu0 0.0
    %793 = vmatpush.xpose.msra.mxu0 0.0
    %794 = vmatpush.xpose.msra.mxu0 0.0
    %795 = vmatpush.xpose.msra.mxu0 0.0
    %796 = vmatpush.xpose.msra.mxu0 0.0
    %v797 = vand.u32 %v781, 4294901760
    %798 = vmatpush.xpose.msra.mxu0 %v797
    %v799 = vand.u32 %v779, 4294901760
    %800 = vmatpush.xpose.msra.mxu0 %v799
    %v801 = vand.u32 %v775, 4294901760
    %v802 = vsub.f32 %v775, %v801
    %v803 = vand.u32 %v802, 4294901760
    %v804 = vsub.f32 %v802, %v803
    %v805 = vand.u32 %v804, 4294901760
    %806 = vmatmul.f32.gmra.mxu0 %v805
    %v807 = vpop.f32.mrf.mxu0
    %v808 = vadd.f32 0.0, %v807
    %v809 = vand.u32 %v777, 4294901760
    %v810 = vsub.f32 %v777, %v809
    %v811 = vand.u32 %v810, 4294901760
    %v812 = vsub.f32 %v810, %v811
    %v813 = vand.u32 %v812, 4294901760
    %814 = vmatmul.f32.gmra.mxu0 %v813
    %v815 = vpop.f32.mrf.mxu0
    %v816 = vadd.f32 0.0, %v815
    %817 = vdwg.mxu0
    %818 = vmatpush.xpose.msra.mxu0 0.0
    %819 = vmatpush.xpose.msra.mxu0 0.0
    %820 = vmatpush.xpose.msra.mxu0 0.0
    %821 = vmatpush.xpose.msra.mxu0 0.0
    %822 = vmatpush.xpose.msra.mxu0 0.0
    %823 = vmatpush.xpose.msra.mxu0 0.0
    %824 = vmatpush.xpose.msra.mxu0 0.0
    %825 = vmatpush.xpose.msra.mxu0 0.0
    %826 = vmatpush.xpose.msra.mxu0 0.0
    %827 = vmatpush.xpose.msra.mxu0 0.0
    %828 = vmatpush.xpose.msra.mxu0 0.0
    %829 = vmatpush.xpose.msra.mxu0 0.0
    %830 = vmatpush.xpose.msra.mxu0 0.0
    %831 = vmatpush.xpose.msra.mxu0 0.0
    %v832 = vand.u32 %v781, 4294901760
    %v833 = vsub.f32 %v781, %v832
    %v834 = vand.u32 %v833, 4294901760
    %v835 = vsub.f32 %v833, %v834
    %v836 = vand.u32 %v835, 4294901760
    %837 = vmatpush.xpose.msra.mxu0 %v836
    %v838 = vand.u32 %v779, 4294901760
    %v839 = vsub.f32 %v779, %v838
    %v840 = vand.u32 %v839, 4294901760
    %v841 = vsub.f32 %v839, %v840
    %v842 = vand.u32 %v841, 4294901760
    %843 = vmatpush.xpose.msra.mxu0 %v842
    %v844 = vand.u32 %v775, 4294901760
    %845 = vmatmul.f32.gmra.mxu0 %v844
    %v846 = vpop.f32.mrf.mxu0
    %v847 = vadd.f32 %v808, %v846
    %v848 = vand.u32 %v777, 4294901760
    %849 = vmatmul.f32.gmra.mxu0 %v848
    %v850 = vpop.f32.mrf.mxu0
    %v851 = vadd.f32 %v816, %v850
    %852 = vdwg.mxu0
    %853 = vmatpush.xpose.msra.mxu0 0.0
    %854 = vmatpush.xpose.msra.mxu0 0.0
    %855 = vmatpush.xpose.msra.mxu0 0.0
    %856 = vmatpush.xpose.msra.mxu0 0.0
    %857 = vmatpush.xpose.msra.mxu0 0.0
    %858 = vmatpush.xpose.msra.mxu0 0.0
    %859 = vmatpush.xpose.msra.mxu0 0.0
    %860 = vmatpush.xpose.msra.mxu0 0.0
    %861 = vmatpush.xpose.msra.mxu0 0.0
    %862 = vmatpush.xpose.msra.mxu0 0.0
    %863 = vmatpush.xpose.msra.mxu0 0.0
    %864 = vmatpush.xpose.msra.mxu0 0.0
    %865 = vmatpush.xpose.msra.mxu0 0.0
    %866 = vmatpush.xpose.msra.mxu0 0.0
    %v867 = vand.u32 %v781, 4294901760
    %v868 = vsub.f32 %v781, %v867
    %869 = vmatpush.xpose.msra.mxu0 %v868
    %v870 = vand.u32 %v779, 4294901760
    %v871 = vsub.f32 %v779, %v870
    %872 = vmatpush.xpose.msra.mxu0 %v871
    %v873 = vand.u32 %v775, 4294901760
    %v874 = vsub.f32 %v775, %v873
    %875 = vmatmul.f32.gmra.mxu0 %v874
    %v876 = vpop.f32.mrf.mxu0
    %v877 = vadd.f32 %v847, %v876
    %v878 = vand.u32 %v777, 4294901760
    %v879 = vsub.f32 %v777, %v878
    %880 = vmatmul.f32.gmra.mxu0 %v879
    %v881 = vpop.f32.mrf.mxu0
    %v882 = vadd.f32 %v851, %v881
    %883 = vdwg.mxu0
    %884 = vmatpush.xpose.msra.mxu0 0.0
    %885 = vmatpush.xpose.msra.mxu0 0.0
    %886 = vmatpush.xpose.msra.mxu0 0.0
    %887 = vmatpush.xpose.msra.mxu0 0.0
    %888 = vmatpush.xpose.msra.mxu0 0.0
    %889 = vmatpush.xpose.msra.mxu0 0.0
    %890 = vmatpush.xpose.msra.mxu0 0.0
    %891 = vmatpush.xpose.msra.mxu0 0.0
    %892 = vmatpush.xpose.msra.mxu0 0.0
    %893 = vmatpush.xpose.msra.mxu0 0.0
    %894 = vmatpush.xpose.msra.mxu0 0.0
    %895 = vmatpush.xpose.msra.mxu0 0.0
    %896 = vmatpush.xpose.msra.mxu0 0.0
    %897 = vmatpush.xpose.msra.mxu0 0.0
    %v898 = vand.u32 %v781, 4294901760
    %899 = vmatpush.xpose.msra.mxu0 %v898
    %v900 = vand.u32 %v779, 4294901760
    %901 = vmatpush.xpose.msra.mxu0 %v900
    %v902 = vand.u32 %v775, 4294901760
    %v903 = vsub.f32 %v775, %v902
    %v904 = vand.u32 %v903, 4294901760
    %905 = vmatmul.f32.gmra.mxu0 %v904
    %v906 = vpop.f32.mrf.mxu0
    %v907 = vadd.f32 %v877, %v906
    %v908 = vand.u32 %v777, 4294901760
    %v909 = vsub.f32 %v777, %v908
    %v910 = vand.u32 %v909, 4294901760
    %911 = vmatmul.f32.gmra.mxu0 %v910
    %v912 = vpop.f32.mrf.mxu0
    %v913 = vadd.f32 %v882, %v912
    %914 = vdwg.mxu0
    %915 = vmatpush.xpose.msra.mxu0 0.0
    %916 = vmatpush.xpose.msra.mxu0 0.0
    %917 = vmatpush.xpose.msra.mxu0 0.0
    %918 = vmatpush.xpose.msra.mxu0 0.0
    %919 = vmatpush.xpose.msra.mxu0 0.0
    %920 = vmatpush.xpose.msra.mxu0 0.0
    %921 = vmatpush.xpose.msra.mxu0 0.0
    %922 = vmatpush.xpose.msra.mxu0 0.0
    %923 = vmatpush.xpose.msra.mxu0 0.0
    %924 = vmatpush.xpose.msra.mxu0 0.0
    %925 = vmatpush.xpose.msra.mxu0 0.0
    %926 = vmatpush.xpose.msra.mxu0 0.0
    %927 = vmatpush.xpose.msra.mxu0 0.0
    %928 = vmatpush.xpose.msra.mxu0 0.0
    %v929 = vand.u32 %v781, 4294901760
    %v930 = vsub.f32 %v781, %v929
    %v931 = vand.u32 %v930, 4294901760
    %932 = vmatpush.xpose.msra.mxu0 %v931
    %v933 = vand.u32 %v779, 4294901760
    %v934 = vsub.f32 %v779, %v933
    %v935 = vand.u32 %v934, 4294901760
    %936 = vmatpush.xpose.msra.mxu0 %v935
    %v937 = vand.u32 %v775, 4294901760
    %938 = vmatmul.f32.gmra.mxu0 %v937
    %v939 = vpop.f32.mrf.mxu0
    %v940 = vadd.f32 %v907, %v939
    %v941 = vand.u32 %v777, 4294901760
    %942 = vmatmul.f32.gmra.mxu0 %v941
    %v943 = vpop.f32.mrf.mxu0
    %v944 = vadd.f32 %v913, %v943
    %945 = vdwg.mxu0
    %946 = vmatpush.xpose.msra.mxu0 0.0
    %947 = vmatpush.xpose.msra.mxu0 0.0
    %948 = vmatpush.xpose.msra.mxu0 0.0
    %949 = vmatpush.xpose.msra.mxu0 0.0
    %950 = vmatpush.xpose.msra.mxu0 0.0
    %951 = vmatpush.xpose.msra.mxu0 0.0
    %952 = vmatpush.xpose.msra.mxu0 0.0
    %953 = vmatpush.xpose.msra.mxu0 0.0
    %954 = vmatpush.xpose.msra.mxu0 0.0
    %955 = vmatpush.xpose.msra.mxu0 0.0
    %956 = vmatpush.xpose.msra.mxu0 0.0
    %957 = vmatpush.xpose.msra.mxu0 0.0
    %958 = vmatpush.xpose.msra.mxu0 0.0
    %959 = vmatpush.xpose.msra.mxu0 0.0
    %v960 = vand.u32 %v781, 4294901760
    %961 = vmatpush.xpose.msra.mxu0 %v960
    %v962 = vand.u32 %v779, 4294901760
    %963 = vmatpush.xpose.msra.mxu0 %v962
    %v964 = vand.u32 %v775, 4294901760
    %965 = vmatmul.f32.gmra.mxu0 %v964
    %v966 = vpop.f32.mrf.mxu0
    %v967 = vadd.f32 %v940, %v966
    %v968 = vand.u32 %v777, 4294901760
    %969 = vmatmul.f32.gmra.mxu0 %v968
    %v970 = vpop.f32.mrf.mxu0
    %v971 = vadd.f32 %v944, %v970
    %972 = vdwg.mxu0
    %v973 = vmul.f32 %v967, 0.31622776
    %v974 = vmul.f32 %v971, 0.31622776
    %v975 = vadd.f32 %v973, %v303
    %v976 = vadd.f32 %v974, %v304
    %v977 = vsel %vm514, %v975, -inf
    %978 = vmax.xlane.f32.xlu0 %v977
    %v979 = vpop.xlane.xlu0 %978
    %v980 = vsel %vm514, %v976, -inf
    %981 = vmax.xlane.f32.xlu0 %v980
    %v982 = vpop.xlane.xlu0 %981
    %v983 = vsub.f32 %v975, %v979
    %v984 = vsub.f32 %v976, %v982
    %v985 = vmul.f32 %v983, 1.442695
    %v986 = vpow.pop %v985
    %v987 = vmul.f32 %v984, 1.442695
    %v988 = vpow.pop %v987
    %v989 = vsel %vm514, %v986, 0.0
    %990 = vadd.xlane.f32.xlu0 %v989
    %v991 = vpop.xlane.xlu0 %990
    %v992 = vsel %vm514, %v988, 0.0
    %993 = vadd.xlane.f32.xlu0 %v992
    %v994 = vpop.xlane.xlu0 %993
    %v995 = vrcp.pop %v991
    %v996 = vmul.f32 %v991, %v995
    %v997 = vsub.f32 1.0, %v996
    %v998 = vmul.f32 %v995, %v997
    %v999 = vadd.f32 %v995, %v998
    %vm1000 = vweird.f32 %v991
    %vm1001 = vweird.f32 %v995
    %vm1002 = vmor %vm1000, %vm1001
    %v1003 = vsel %vm1002, %v995, %v999
    %v1004 = vand.u32 2147483647, %v991
    %vm1005 = vcmp.eq.f32.partialorder %v1004, 8.507059e+37
    %v1006 = vand.u32 %v991, 2147483648
    %v1007 = vor.u32 1.1754944e-38, %v1006
    %v1008 = vsel %vm1005, %v1007, %v1003
    %v1009 = vmul.f32 %v986, %v1008
    %v1010 = vrcp.pop %v994
    %v1011 = vmul.f32 %v994, %v1010
    %v1012 = vsub.f32 1.0, %v1011
    %v1013 = vmul.f32 %v1010, %v1012
    %v1014 = vadd.f32 %v1010, %v1013
    %vm1015 = vweird.f32 %v994
    %vm1016 = vweird.f32 %v1010
    %vm1017 = vmor %vm1015, %vm1016
    %v1018 = vsel %vm1017, %v1010, %v1014
    %v1019 = vand.u32 2147483647, %v994
    %vm1020 = vcmp.eq.f32.partialorder %v1019, 8.507059e+37
    %v1021 = vand.u32 %v994, 2147483648
    %v1022 = vor.u32 1.1754944e-38, %v1021
    %v1023 = vsel %vm1020, %v1022, %v1018
    %v1024 = vmul.f32 %v988, %v1023
    %s1025 = scalar_lea.vmem %s4, 16
    %1026 = vst.msk [vmem:[%s1025] sm:$0xff] %vm514, %v1009
    %1027 = vst.msk [vmem:[%s1025 + $0x8] sm:$0xff] %vm514, %v1024
    %1028 = vrot.lane.b32.xlu0 %v266, 78
    %v1029 = vpop.permute.xlu0 %1028
    %1030 = vrot.lane.b32.xlu0 %v270, 78
    %v1031 = vpop.permute.xlu0 %1030
    %v1035 = vsel %vm514, %v1009, 0
    %v1038 = vsel %vm514, %v1024, 0
    %1040 = vmatpush.msra.mxu0 0.0
    %1041 = vmatpush.msra.mxu0 0.0
    %1042 = vmatpush.msra.mxu0 0.0
    %1043 = vmatpush.msra.mxu0 0.0
    %1044 = vmatpush.msra.mxu0 0.0
    %1045 = vmatpush.msra.mxu0 0.0
    %1046 = vmatpush.msra.mxu0 0.0
    %1047 = vmatpush.msra.mxu0 0.0
    %1048 = vmatpush.msra.mxu0 0.0
    %1049 = vmatpush.msra.mxu0 0.0
    %1050 = vmatpush.msra.mxu0 0.0
    %1051 = vmatpush.msra.mxu0 0.0
    %1052 = vmatpush.msra.mxu0 0.0
    %1053 = vmatpush.msra.mxu0 0.0
    %v1054 = vand.u32 %v1031, 4294901760
    %1055 = vmatpush.msra.mxu0 %v1054
    %v1056 = vand.u32 %v1029, 4294901760
    %1057 = vmatpush.msra.mxu0 %v1056
    %v1058 = vand.u32 %v1035, 4294901760
    %v1059 = vsub.f32 %v1035, %v1058
    %v1060 = vand.u32 %v1059, 4294901760
    %v1061 = vsub.f32 %v1059, %v1060
    %v1062 = vand.u32 %v1061, 4294901760
    %1063 = vmatmul.f32.gmra.mxu0 %v1062
    %v1064 = vpop.f32.mrf.mxu0
    %v1065 = vadd.f32 0.0, %v1064
    %v1066 = vand.u32 %v1038, 4294901760
    %v1067 = vsub.f32 %v1038, %v1066
    %v1068 = vand.u32 %v1067, 4294901760
    %v1069 = vsub.f32 %v1067, %v1068
    %v1070 = vand.u32 %v1069, 4294901760
    %1071 = vmatmul.f32.gmra.mxu0 %v1070
    %v1072 = vpop.f32.mrf.mxu0
    %v1073 = vadd.f32 0.0, %v1072
    %1074 = vdwg.mxu0
    %1075 = vmatpush.msra.mxu0 0.0
    %1076 = vmatpush.msra.mxu0 0.0
    %1077 = vmatpush.msra.mxu0 0.0
    %1078 = vmatpush.msra.mxu0 0.0
    %1079 = vmatpush.msra.mxu0 0.0
    %1080 = vmatpush.msra.mxu0 0.0
    %1081 = vmatpush.msra.mxu0 0.0
    %1082 = vmatpush.msra.mxu0 0.0
    %1083 = vmatpush.msra.mxu0 0.0
    %1084 = vmatpush.msra.mxu0 0.0
    %1085 = vmatpush.msra.mxu0 0.0
    %1086 = vmatpush.msra.mxu0 0.0
    %1087 = vmatpush.msra.mxu0 0.0
    %1088 = vmatpush.msra.mxu0 0.0
    %v1089 = vand.u32 %v1031, 4294901760
    %v1090 = vsub.f32 %v1031, %v1089
    %v1091 = vand.u32 %v1090, 4294901760
    %v1092 = vsub.f32 %v1090, %v1091
    %v1093 = vand.u32 %v1092, 4294901760
    %1094 = vmatpush.msra.mxu0 %v1093
    %v1095 = vand.u32 %v1029, 4294901760
    %v1096 = vsub.f32 %v1029, %v1095
    %v1097 = vand.u32 %v1096, 4294901760
    %v1098 = vsub.f32 %v1096, %v1097
    %v1099 = vand.u32 %v1098, 4294901760
    %1100 = vmatpush.msra.mxu0 %v1099
    %v1101 = vand.u32 %v1035, 4294901760
    %1102 = vmatmul.f32.gmra.mxu0 %v1101
    %v1103 = vpop.f32.mrf.mxu0
    %v1104 = vadd.f32 %v1065, %v1103
    %v1105 = vand.u32 %v1038, 4294901760
    %1106 = vmatmul.f32.gmra.mxu0 %v1105
    %v1107 = vpop.f32.mrf.mxu0
    %v1108 = vadd.f32 %v1073, %v1107
    %1109 = vdwg.mxu0
    %1110 = vmatpush.msra.mxu0 0.0
    %1111 = vmatpush.msra.mxu0 0.0
    %1112 = vmatpush.msra.mxu0 0.0
    %1113 = vmatpush.msra.mxu0 0.0
    %1114 = vmatpush.msra.mxu0 0.0
    %1115 = vmatpush.msra.mxu0 0.0
    %1116 = vmatpush.msra.mxu0 0.0
    %1117 = vmatpush.msra.mxu0 0.0
    %1118 = vmatpush.msra.mxu0 0.0
    %1119 = vmatpush.msra.mxu0 0.0
    %1120 = vmatpush.msra.mxu0 0.0
    %1121 = vmatpush.msra.mxu0 0.0
    %1122 = vmatpush.msra.mxu0 0.0
    %1123 = vmatpush.msra.mxu0 0.0
    %v1124 = vand.u32 %v1031, 4294901760
    %v1125 = vsub.f32 %v1031, %v1124
    %1126 = vmatpush.msra.mxu0 %v1125
    %v1127 = vand.u32 %v1029, 4294901760
    %v1128 = vsub.f32 %v1029, %v1127
    %1129 = vmatpush.msra.mxu0 %v1128
    %v1130 = vand.u32 %v1035, 4294901760
    %v1131 = vsub.f32 %v1035, %v1130
    %1132 = vmatmul.f32.gmra.mxu0 %v1131
    %v1133 = vpop.f32.mrf.mxu0
    %v1134 = vadd.f32 %v1104, %v1133
    %v1135 = vand.u32 %v1038, 4294901760
    %v1136 = vsub.f32 %v1038, %v1135
    %1137 = vmatmul.f32.gmra.mxu0 %v1136
    %v1138 = vpop.f32.mrf.mxu0
    %v1139 = vadd.f32 %v1108, %v1138
    %1140 = vdwg.mxu0
    %1141 = vmatpush.msra.mxu0 0.0
    %1142 = vmatpush.msra.mxu0 0.0
    %1143 = vmatpush.msra.mxu0 0.0
    %1144 = vmatpush.msra.mxu0 0.0
    %1145 = vmatpush.msra.mxu0 0.0
    %1146 = vmatpush.msra.mxu0 0.0
    %1147 = vmatpush.msra.mxu0 0.0
    %1148 = vmatpush.msra.mxu0 0.0
    %1149 = vmatpush.msra.mxu0 0.0
    %1150 = vmatpush.msra.mxu0 0.0
    %1151 = vmatpush.msra.mxu0 0.0
    %1152 = vmatpush.msra.mxu0 0.0
    %1153 = vmatpush.msra.mxu0 0.0
    %1154 = vmatpush.msra.mxu0 0.0
    %v1155 = vand.u32 %v1031, 4294901760
    %1156 = vmatpush.msra.mxu0 %v1155
    %v1157 = vand.u32 %v1029, 4294901760
    %1158 = vmatpush.msra.mxu0 %v1157
    %v1159 = vand.u32 %v1035, 4294901760
    %v1160 = vsub.f32 %v1035, %v1159
    %v1161 = vand.u32 %v1160, 4294901760
    %1162 = vmatmul.f32.gmra.mxu0 %v1161
    %v1163 = vpop.f32.mrf.mxu0
    %v1164 = vadd.f32 %v1134, %v1163
    %v1165 = vand.u32 %v1038, 4294901760
    %v1166 = vsub.f32 %v1038, %v1165
    %v1167 = vand.u32 %v1166, 4294901760
    %1168 = vmatmul.f32.gmra.mxu0 %v1167
    %v1169 = vpop.f32.mrf.mxu0
    %v1170 = vadd.f32 %v1139, %v1169
    %1171 = vdwg.mxu0
    %1172 = vmatpush.msra.mxu0 0.0
    %1173 = vmatpush.msra.mxu0 0.0
    %1174 = vmatpush.msra.mxu0 0.0
    %1175 = vmatpush.msra.mxu0 0.0
    %1176 = vmatpush.msra.mxu0 0.0
    %1177 = vmatpush.msra.mxu0 0.0
    %1178 = vmatpush.msra.mxu0 0.0
    %1179 = vmatpush.msra.mxu0 0.0
    %1180 = vmatpush.msra.mxu0 0.0
    %1181 = vmatpush.msra.mxu0 0.0
    %1182 = vmatpush.msra.mxu0 0.0
    %1183 = vmatpush.msra.mxu0 0.0
    %1184 = vmatpush.msra.mxu0 0.0
    %1185 = vmatpush.msra.mxu0 0.0
    %v1186 = vand.u32 %v1031, 4294901760
    %v1187 = vsub.f32 %v1031, %v1186
    %v1188 = vand.u32 %v1187, 4294901760
    %1189 = vmatpush.msra.mxu0 %v1188
    %v1190 = vand.u32 %v1029, 4294901760
    %v1191 = vsub.f32 %v1029, %v1190
    %v1192 = vand.u32 %v1191, 4294901760
    %1193 = vmatpush.msra.mxu0 %v1192
    %v1194 = vand.u32 %v1035, 4294901760
    %1195 = vmatmul.f32.gmra.mxu0 %v1194
    %v1196 = vpop.f32.mrf.mxu0
    %v1197 = vadd.f32 %v1164, %v1196
    %v1198 = vand.u32 %v1038, 4294901760
    %1199 = vmatmul.f32.gmra.mxu0 %v1198
    %v1200 = vpop.f32.mrf.mxu0
    %v1201 = vadd.f32 %v1170, %v1200
    %1202 = vdwg.mxu0
    %1203 = vmatpush.msra.mxu0 0.0
    %1204 = vmatpush.msra.mxu0 0.0
    %1205 = vmatpush.msra.mxu0 0.0
    %1206 = vmatpush.msra.mxu0 0.0
    %1207 = vmatpush.msra.mxu0 0.0
    %1208 = vmatpush.msra.mxu0 0.0
    %1209 = vmatpush.msra.mxu0 0.0
    %1210 = vmatpush.msra.mxu0 0.0
    %1211 = vmatpush.msra.mxu0 0.0
    %1212 = vmatpush.msra.mxu0 0.0
    %1213 = vmatpush.msra.mxu0 0.0
    %1214 = vmatpush.msra.mxu0 0.0
    %1215 = vmatpush.msra.mxu0 0.0
    %1216 = vmatpush.msra.mxu0 0.0
    %v1217 = vand.u32 %v1031, 4294901760
    %1218 = vmatpush.msra.mxu0 %v1217
    %v1219 = vand.u32 %v1029, 4294901760
    %1220 = vmatpush.msra.mxu0 %v1219
    %v1221 = vand.u32 %v1035, 4294901760
    %1222 = vmatmul.f32.gmra.mxu0 %v1221
    %v1223 = vpop.f32.mrf.mxu0
    %v1224 = vadd.f32 %v1197, %v1223
    %v1225 = vand.u32 %v1038, 4294901760
    %1226 = vmatmul.f32.gmra.mxu0 %v1225
    %v1227 = vpop.f32.mrf.mxu0
    %v1228 = vadd.f32 %v1201, %v1227
    %1229 = vdwg.mxu0
    %1232 = vrot.lane.b32.xlu0 %v1224, 10
    %v1233 = vpop.permute.xlu0 %1232
    %1234 = vrot.lane.b32.xlu0 %v1228, 10
    %v1235 = vpop.permute.xlu0 %1234
    %v1238 = vsel %vm311, %v761, %v1233
    %v1239 = vsel %vm311, %v765, %v1235
    %1242 = vrot.lane.b32.xlu0 %v51, 68
    %v1243 = vpop.permute.xlu0 %1242
    %1244 = vrot.lane.b32.xlu0 %v52, 68
    %v1245 = vpop.permute.xlu0 %1244
    %1246 = vrot.lane.b32.xlu0 %v53, 68
    %v1247 = vpop.permute.xlu0 %1246
    %1250 = vrot.lane.b32.xlu0 %v56, 68
    %v1251 = vpop.permute.xlu0 %1250
    %v1254 = vsel %vm58, %v1238, 0
    %v1257 = vsel %vm58, %v1239, 0
    %v1259 = vsel %vm65, %v1247, 0
    %1261 = vmatpush.msra.mxu0 0.0
    %1262 = vmatpush.msra.mxu0 0.0
    %1263 = vmatpush.msra.mxu0 0.0
    %1264 = vmatpush.msra.mxu0 0.0
    %1265 = vmatpush.msra.mxu0 0.0
    %1266 = vmatpush.msra.mxu0 0.0
    %1267 = vmatpush.msra.mxu0 0.0
    %1268 = vmatpush.msra.mxu0 0.0
    %1269 = vmatpush.msra.mxu0 0.0
    %1270 = vmatpush.msra.mxu0 0.0
    %1271 = vmatpush.msra.mxu0 0.0
    %1272 = vmatpush.msra.mxu0 0.0
    %1273 = vmatpush.msra.mxu0 0.0
    %v1274 = vand.u32 %v1259, 4294901760
    %1275 = vmatpush.msra.mxu0 %v1274
    %v1276 = vand.u32 %v1245, 4294901760
    %1277 = vmatpush.msra.mxu0 %v1276
    %v1278 = vand.u32 %v1243, 4294901760
    %1279 = vmatpush.msra.mxu0 %v1278
    %v1280 = vand.u32 %v1254, 4294901760
    %v1281 = vsub.f32 %v1254, %v1280
    %v1282 = vand.u32 %v1281, 4294901760
    %v1283 = vsub.f32 %v1281, %v1282
    %v1284 = vand.u32 %v1283, 4294901760
    %1285 = vmatmul.f32.gmra.mxu0 %v1284
    %v1286 = vpop.f32.mrf.mxu0
    %v1287 = vadd.f32 %v1251, %v1286
    %v1288 = vand.u32 %v1257, 4294901760
    %v1289 = vsub.f32 %v1257, %v1288
    %v1290 = vand.u32 %v1289, 4294901760
    %v1291 = vsub.f32 %v1289, %v1290
    %v1292 = vand.u32 %v1291, 4294901760
    %1293 = vmatmul.f32.gmra.mxu0 %v1292
    %v1294 = vpop.f32.mrf.mxu0
    %v1295 = vadd.f32 %v1251, %v1294
    %1296 = vdwg.mxu0
    %1297 = vmatpush.msra.mxu0 0.0
    %1298 = vmatpush.msra.mxu0 0.0
    %1299 = vmatpush.msra.mxu0 0.0
    %1300 = vmatpush.msra.mxu0 0.0
    %1301 = vmatpush.msra.mxu0 0.0
    %1302 = vmatpush.msra.mxu0 0.0
    %1303 = vmatpush.msra.mxu0 0.0
    %1304 = vmatpush.msra.mxu0 0.0
    %1305 = vmatpush.msra.mxu0 0.0
    %1306 = vmatpush.msra.mxu0 0.0
    %1307 = vmatpush.msra.mxu0 0.0
    %1308 = vmatpush.msra.mxu0 0.0
    %1309 = vmatpush.msra.mxu0 0.0
    %v1310 = vand.u32 %v1259, 4294901760
    %v1311 = vsub.f32 %v1259, %v1310
    %v1312 = vand.u32 %v1311, 4294901760
    %v1313 = vsub.f32 %v1311, %v1312
    %v1314 = vand.u32 %v1313, 4294901760
    %1315 = vmatpush.msra.mxu0 %v1314
    %v1316 = vand.u32 %v1245, 4294901760
    %v1317 = vsub.f32 %v1245, %v1316
    %v1318 = vand.u32 %v1317, 4294901760
    %v1319 = vsub.f32 %v1317, %v1318
    %v1320 = vand.u32 %v1319, 4294901760
    %1321 = vmatpush.msra.mxu0 %v1320
    %v1322 = vand.u32 %v1243, 4294901760
    %v1323 = vsub.f32 %v1243, %v1322
    %v1324 = vand.u32 %v1323, 4294901760
    %v1325 = vsub.f32 %v1323, %v1324
    %v1326 = vand.u32 %v1325, 4294901760
    %1327 = vmatpush.msra.mxu0 %v1326
    %v1328 = vand.u32 %v1254, 4294901760
    %1329 = vmatmul.f32.gmra.mxu0 %v1328
    %v1330 = vpop.f32.mrf.mxu0
    %v1331 = vadd.f32 %v1287, %v1330
    %v1332 = vand.u32 %v1257, 4294901760
    %1333 = vmatmul.f32.gmra.mxu0 %v1332
    %v1334 = vpop.f32.mrf.mxu0
    %v1335 = vadd.f32 %v1295, %v1334
    %1336 = vdwg.mxu0
    %1337 = vmatpush.msra.mxu0 0.0
    %1338 = vmatpush.msra.mxu0 0.0
    %1339 = vmatpush.msra.mxu0 0.0
    %1340 = vmatpush.msra.mxu0 0.0
    %1341 = vmatpush.msra.mxu0 0.0
    %1342 = vmatpush.msra.mxu0 0.0
    %1343 = vmatpush.msra.mxu0 0.0
    %1344 = vmatpush.msra.mxu0 0.0
    %1345 = vmatpush.msra.mxu0 0.0
    %1346 = vmatpush.msra.mxu0 0.0
    %1347 = vmatpush.msra.mxu0 0.0
    %1348 = vmatpush.msra.mxu0 0.0
    %1349 = vmatpush.msra.mxu0 0.0
    %v1350 = vand.u32 %v1259, 4294901760
    %v1351 = vsub.f32 %v1259, %v1350
    %1352 = vmatpush.msra.mxu0 %v1351
    %v1353 = vand.u32 %v1245, 4294901760
    %v1354 = vsub.f32 %v1245, %v1353
    %1355 = vmatpush.msra.mxu0 %v1354
    %v1356 = vand.u32 %v1243, 4294901760
    %v1357 = vsub.f32 %v1243, %v1356
    %1358 = vmatpush.msra.mxu0 %v1357
    %v1359 = vand.u32 %v1254, 4294901760
    %v1360 = vsub.f32 %v1254, %v1359
    %1361 = vmatmul.f32.gmra.mxu0 %v1360
    %v1362 = vpop.f32.mrf.mxu0
    %v1363 = vadd.f32 %v1331, %v1362
    %v1364 = vand.u32 %v1257, 4294901760
    %v1365 = vsub.f32 %v1257, %v1364
    %1366 = vmatmul.f32.gmra.mxu0 %v1365
    %v1367 = vpop.f32.mrf.mxu0
    %v1368 = vadd.f32 %v1335, %v1367
    %1369 = vdwg.mxu0
    %1370 = vmatpush.msra.mxu0 0.0
    %1371 = vmatpush.msra.mxu0 0.0
    %1372 = vmatpush.msra.mxu0 0.0
    %1373 = vmatpush.msra.mxu0 0.0
    %1374 = vmatpush.msra.mxu0 0.0
    %1375 = vmatpush.msra.mxu0 0.0
    %1376 = vmatpush.msra.mxu0 0.0
    %1377 = vmatpush.msra.mxu0 0.0
    %1378 = vmatpush.msra.mxu0 0.0
    %1379 = vmatpush.msra.mxu0 0.0
    %1380 = vmatpush.msra.mxu0 0.0
    %1381 = vmatpush.msra.mxu0 0.0
    %1382 = vmatpush.msra.mxu0 0.0
    %v1383 = vand.u32 %v1259, 4294901760
    %1384 = vmatpush.msra.mxu0 %v1383
    %v1385 = vand.u32 %v1245, 4294901760
    %1386 = vmatpush.msra.mxu0 %v1385
    %v1387 = vand.u32 %v1243, 4294901760
    %1388 = vmatpush.msra.mxu0 %v1387
    %v1389 = vand.u32 %v1254, 4294901760
    %v1390 = vsub.f32 %v1254, %v1389
    %v1391 = vand.u32 %v1390, 4294901760
    %1392 = vmatmul.f32.gmra.mxu0 %v1391
    %v1393 = vpop.f32.mrf.mxu0
    %v1394 = vadd.f32 %v1363, %v1393
    %v1395 = vand.u32 %v1257, 4294901760
    %v1396 = vsub.f32 %v1257, %v1395
    %v1397 = vand.u32 %v1396, 4294901760
    %1398 = vmatmul.f32.gmra.mxu0 %v1397
    %v1399 = vpop.f32.mrf.mxu0
    %v1400 = vadd.f32 %v1368, %v1399
    %1401 = vdwg.mxu0
    %1402 = vmatpush.msra.mxu0 0.0
    %1403 = vmatpush.msra.mxu0 0.0
    %1404 = vmatpush.msra.mxu0 0.0
    %1405 = vmatpush.msra.mxu0 0.0
    %1406 = vmatpush.msra.mxu0 0.0
    %1407 = vmatpush.msra.mxu0 0.0
    %1408 = vmatpush.msra.mxu0 0.0
    %1409 = vmatpush.msra.mxu0 0.0
    %1410 = vmatpush.msra.mxu0 0.0
    %1411 = vmatpush.msra.mxu0 0.0
    %1412 = vmatpush.msra.mxu0 0.0
    %1413 = vmatpush.msra.mxu0 0.0
    %1414 = vmatpush.msra.mxu0 0.0
    %v1415 = vand.u32 %v1259, 4294901760
    %v1416 = vsub.f32 %v1259, %v1415
    %v1417 = vand.u32 %v1416, 4294901760
    %1418 = vmatpush.msra.mxu0 %v1417
    %v1419 = vand.u32 %v1245, 4294901760
    %v1420 = vsub.f32 %v1245, %v1419
    %v1421 = vand.u32 %v1420, 4294901760
    %1422 = vmatpush.msra.mxu0 %v1421
    %v1423 = vand.u32 %v1243, 4294901760
    %v1424 = vsub.f32 %v1243, %v1423
    %v1425 = vand.u32 %v1424, 4294901760
    %1426 = vmatpush.msra.mxu0 %v1425
    %v1427 = vand.u32 %v1254, 4294901760
    %1428 = vmatmul.f32.gmra.mxu0 %v1427
    %v1429 = vpop.f32.mrf.mxu0
    %v1430 = vadd.f32 %v1394, %v1429
    %v1431 = vand.u32 %v1257, 4294901760
    %1432 = vmatmul.f32.gmra.mxu0 %v1431
    %v1433 = vpop.f32.mrf.mxu0
    %v1434 = vadd.f32 %v1400, %v1433
    %1435 = vdwg.mxu0
    %1436 = vmatpush.msra.mxu0 0.0
    %1437 = vmatpush.msra.mxu0 0.0
    %1438 = vmatpush.msra.mxu0 0.0
    %1439 = vmatpush.msra.mxu0 0.0
    %1440 = vmatpush.msra.mxu0 0.0
    %1441 = vmatpush.msra.mxu0 0.0
    %1442 = vmatpush.msra.mxu0 0.0
    %1443 = vmatpush.msra.mxu0 0.0
    %1444 = vmatpush.msra.mxu0 0.0
    %1445 = vmatpush.msra.mxu0 0.0
    %1446 = vmatpush.msra.mxu0 0.0
    %1447 = vmatpush.msra.mxu0 0.0
    %1448 = vmatpush.msra.mxu0 0.0
    %v1449 = vand.u32 %v1259, 4294901760
    %1450 = vmatpush.msra.mxu0 %v1449
    %v1451 = vand.u32 %v1245, 4294901760
    %1452 = vmatpush.msra.mxu0 %v1451
    %v1453 = vand.u32 %v1243, 4294901760
    %1454 = vmatpush.msra.mxu0 %v1453
    %v1455 = vand.u32 %v1254, 4294901760
    %1456 = vmatmul.f32.gmra.mxu0 %v1455
    %v1457 = vpop.f32.mrf.mxu0
    %v1458 = vadd.f32 %v1430, %v1457
    %v1459 = vand.u32 %v1257, 4294901760
    %1460 = vmatmul.f32.gmra.mxu0 %v1459
    %v1461 = vpop.f32.mrf.mxu0
    %v1462 = vadd.f32 %v1434, %v1461
    %1463 = vdwg.mxu0
    %1464 = vst.msk [vmem:[#allocation7] sm:$0xff] %vm58, %v1458
    %1465 = vst.msk [vmem:[#allocation7 + $0x8] sm:$0xff] %vm58, %v1462
    // Predicated region
    $region22: #{_siglip_attention_nomask.1} parent=1 // pred_check
      _
    $region23: #{_siglip_attention_nomask.1} parent=1 // pred_check_branch
      %1467 = sbr.rel (0) target = $region25
    $region24: #{_siglip_attention_nomask.1} parent=1 // pred_region
      %1469 = vsyncadd [#allocation4], 0
      %s1470 = sshll.u32 [#allocation7], 4
      %s1471 = int_to_ptr.vmem [resolvable:$true] %s1470
      %s1472 = sshll.u32 %s3, 4
      %s1473 = int_to_ptr.hbm [resolvable:$true] %s1472
      %1478 = dma.vmem_to_hbm [thread:$0]  %s1471, 256, %s1473, [#allocation4], 128, 128, 8
    $region25: #{_siglip_attention_nomask.1} parent=1 // pred_fallthru
      _
    // Predicated region
    $region26: #{_siglip_attention_nomask.1} parent=1 // pred_check
      _
    $region27: #{_siglip_attention_nomask.1} parent=1 // pred_check_branch
      %1480 = sbr.rel (0) target = $region29
    $region28: #{_siglip_attention_nomask.1} parent=1 // pred_region
      _
    $region29: #{_siglip_attention_nomask.1} parent=1 // pred_fallthru
      _
    // Predicated region
    $region30: #{_siglip_attention_nomask.1} parent=1 // pred_check
      _
    $region31: #{_siglip_attention_nomask.1} parent=1 // pred_check_branch
      %1482 = sbr.rel (0) target = $region33
    $region32: #{_siglip_attention_nomask.1} parent=1 // pred_region
      %1484 = dma.done [#allocation4], 256
    $region33: #{_siglip_attention_nomask.1} parent=1 // pred_fallthru
      _
    // Predicated region
    $region34: #{_siglip_attention_nomask.1} parent=1 // pred_check
      _
    $region35: #{_siglip_attention_nomask.1} parent=1 // pred_check_branch
      %1486 = sbr.rel (0) target = $region37
    $region36: #{_siglip_attention_nomask.1} parent=1 // pred_region
      _
    $region37: #{_siglip_attention_nomask.1} parent=1 // pred_fallthru
      _
    %1487 = vsyncpa [#allocation3], 1
    %1488 = vsyncpa [#allocation6], 1
    %1489 = vsyncpa [#allocation4], 1

</llo_original>
